<compile_context>
chip_gen: v7x
topology: tpu7x:2x2x1
jax: 0.10.0
libtpu: 0.0.40
codegen_flags: <defaults>
</compile_context>

<pallas_src>
import jax
import jax.numpy as jnp
from jax.experimental import pallas as pl
from jax.experimental.pallas import tpu as pltpu


# ----------------------------- small helpers -----------------------------

def _round_up(x, m):
    return (x + m - 1) // m * m


def _split_tiles(total, align, tile_max, min_tiles=2):
    """Pick (tile, padded_total, num_tiles).

    tile is a multiple of `align`, padded_total = tile * num_tiles >= total,
    and num_tiles >= min_tiles whenever total is large enough (so v7x's two
    TensorCores both get work on a "parallel" grid axis).
    """
    q = _round_up(total, align) // align            # number of `align` chunks
    nt = min(q, max(min_tiles, -(-total // tile_max)))
    nt = max(nt, 1)
    tile = align * (-(-q // nt))
    return tile, tile * nt, nt


# ----------------------------- Pallas kernels -----------------------------

def _conv_bias_relu_kernel(w_ref, p_ref, b_ref, o_ref):
    # w: [OC_pad, K] bf16, p: [K, TM] bf16, b: [OC_pad, 1] f32 -> o: [OC_pad, TM] bf16
    acc = jnp.dot(w_ref[...], p_ref[...], preferred_element_type=jnp.float32)
    o_ref[...] = jnp.maximum(acc + b_ref[...], 0.0).astype(o_ref.dtype)


def _mlp_kernel(x_ref, w1_ref, b1_ref, w2_ref, b2_ref, w3_ref, b3_ref, o_ref):
    # x: [TB, 400] bf16; weights pre-transposed [K, N_pad] bf16; biases [1, N_pad] f32.
    h = jnp.dot(x_ref[...], w1_ref[...], preferred_element_type=jnp.float32)
    h = jnp.maximum(h + b1_ref[...], 0.0).astype(jnp.bfloat16)
    h = jnp.dot(h, w2_ref[...], preferred_element_type=jnp.float32)
    h = jnp.maximum(h + b2_ref[...], 0.0).astype(jnp.bfloat16)
    y = jnp.dot(h, w3_ref[...], preferred_element_type=jnp.float32) + b3_ref[...]
    o_ref[...] = y.astype(o_ref.dtype)


# ----------------------------- conv via im2col -----------------------------

def _im2col_cnhw(x, k, m_pad):
    """x: [C, B, H, W] -> patches [C*k*k, m_pad] bf16 (zero-padded along M).

    K row order  = c*k*k + di*k + dj   (matches torch weight.reshape(OC, C*k*k))
    M col order  = b*OH*OW + oh*OW + ow
    Single jnp expression chain -> XLA fuses stack/reshape/pad/cast into one
    producer writing the bf16 padded operand once.
    """
    C, B, H, W = x.shape
    OH, OW = H - k + 1, W - k + 1
    M = B * OH * OW
    cols = [x[:, :, di:di + OH, dj:dj + OW]
            for di in range(k) for dj in range(k)]           # each [C, B, OH, OW]
    p = jnp.stack(cols, axis=1).reshape(C * k * k, M)
    p = jnp.pad(p, ((0, 0), (0, m_pad - M)))
    return p.astype(jnp.bfloat16)


def conv2d_relu_cnhw(x, w_pad, b_pad, oc, k, *, tm_max=2048):
    """Valid conv (stride 1) + bias + ReLU on a CNHW tensor.

    x:     [C, B, H, W]   (f32 or bf16)
    w_pad: [OC_pad, K]    bf16  (pre-reshaped PyTorch weight, OC zero-padded)
    b_pad: [OC_pad, 1]    f32
    returns [oc, B, OH, OW] bf16 (CNHW)
    """
    C, B, H, W = x.shape
    OC_pad, K = w_pad.shape
    OH, OW = H - k + 1, W - k + 1
    M = B * OH * OW

    tm, M_pad, nt = _split_tiles(M, 128, tm_max)             # lane-dense tiles
    patches = _im2col_cnhw(x, k, M_pad)                      # [K, M_pad] bf16

    out = pl.pallas_call(
        _conv_bias_relu_kernel,
        out_shape=jax.ShapeDtypeStruct((OC_pad, M_pad), jnp.bfloat16),
        grid_spec=pltpu.PrefetchScalarGridSpec(
            num_scalar_prefetch=0,
            grid=(nt,),
            in_specs=[
                pl.BlockSpec((OC_pad, K), lambda i: (0, 0)),  # weights (resident)
                pl.BlockSpec((K, tm), lambda i: (0, i)),      # patch tile (pipelined)
                pl.BlockSpec((OC_pad, 1), lambda i: (0, 0)),  # bias (resident)
            ],
            out_specs=pl.BlockSpec((OC_pad, tm), lambda i: (0, i)),
        ),
        compiler_params=pltpu.CompilerParams(
            dimension_semantics=("parallel",),
        ),
        cost_estimate=pl.CostEstimate(
            flops=2 * OC_pad * K * M_pad,
            transcendentals=0,
            bytes_accessed=2 * (OC_pad * K + K * M_pad + OC_pad * M_pad) + 4 * OC_pad,
        ),
    )(w_pad, patches, b_pad)

    return out[:oc, :M].reshape(oc, B, OH, OW)               # no transpose needed


# ----------------------------- avg pool (plain JAX) -----------------------------

def avgpool2x2(x):
    # 2x2, stride-2 average over the trailing two dims (layout agnostic).
    # Deliberately plain JAX: fused strided adds; see module TODO about fusing
    # into the conv epilogue.
    return 0.25 * (x[..., ::2, ::2] + x[..., 1::2, ::2]
                   + x[..., ::2, 1::2] + x[..., 1::2, 1::2])


# ----------------------------- fused fc1/fc2/fc3 -----------------------------

def mlp_fused(x, w1, b1, w2, b2, w3, b3, *, tb_max=512):
    """fc3(relu(fc2(relu(fc1(x))))) in one pallas_call.  x: [B, 400]."""
    B, K1 = x.shape
    N3p = w3.shape[1]

    # 16-row alignment (bf16 sublane tile); >=2 tiles when batch allows (v7x).
    tb, B_pad, nt = _split_tiles(B, 16, tb_max)
    x_p = jnp.pad(x, ((0, B_pad - B), (0, 0))).astype(jnp.bfloat16)

    out = pl.pallas_call(
        _mlp_kernel,
        out_shape=jax.ShapeDtypeStruct((B_pad, N3p), jnp.float32),
        grid_spec=pltpu.PrefetchScalarGridSpec(
            num_scalar_prefetch=0,
            grid=(nt,),
            in_specs=[
                pl.BlockSpec((tb, K1), lambda i: (i, 0)),
                pl.BlockSpec(w1.shape, lambda i: (0, 0)),
                pl.BlockSpec(b1.shape, lambda i: (0, 0)),
                pl.BlockSpec(w2.shape, lambda i: (0, 0)),
                pl.BlockSpec(b2.shape, lambda i: (0, 0)),
                pl.BlockSpec(w3.shape, lambda i: (0, 0)),
                pl.BlockSpec(b3.shape, lambda i: (0, 0)),
            ],
            out_specs=pl.BlockSpec((tb, N3p), lambda i: (i, 0)),
        ),
        compiler_params=pltpu.CompilerParams(
            dimension_semantics=("parallel",),
        ),
        cost_estimate=pl.CostEstimate(
            flops=2 * B_pad * (w1.shape[0] * w1.shape[1]
                               + w2.shape[0] * w2.shape[1]
                               + w3.shape[0] * w3.shape[1]),
            transcendentals=0,
            bytes_accessed=2 * (B_pad * K1 + w1.size + w2.size + w3.size)
                           + 4 * B_pad * N3p,
        ),
    )(x_p, w1, b1, w2, b2, w3, b3)
    return out            # caller slices [:B, :n_classes]


# ----------------------------- parameter init / prep -----------------------------

def _kaiming_uniform(key, shape, fan_in):
    # matches the module's nn.init.kaiming_uniform_(..., nonlinearity='relu'):
    # bound = sqrt(2) * sqrt(3 / fan_in) = sqrt(6 / fan_in)
    bound = jnp.sqrt(6.0 / fan_in)
    return jax.random.uniform(key, shape, jnp.float32, -bound, bound)


def init_lenet5a_params(key):
    """Raw parameters in the exact PyTorch shapes (zero biases per the module)."""
    ks = jax.random.split(key, 5)
    return {
        "conv1_w": _kaiming_uniform(ks[0], (6, 3, 5, 5), 3 * 5 * 5),
        "conv1_b": jnp.zeros((6,), jnp.float32),
        "conv2_w": _kaiming_uniform(ks[1], (16, 6, 5, 5), 6 * 5 * 5),
        "conv2_b": jnp.zeros((16,), jnp.float32),
        "fc1_w": _kaiming_uniform(ks[2], (120, 400), 400),
        "fc1_b": jnp.zeros((120,), jnp.float32),
        "fc2_w": _kaiming_uniform(ks[3], (84, 120), 120),
        "fc2_b": jnp.zeros((84,), jnp.float32),
        "fc3_w": _kaiming_uniform(ks[4], (10, 84), 84),
        "fc3_b": jnp.zeros((10,), jnp.float32),
    }


def prepare_params(p):
    """One-time reshape / zero-pad / bf16-cast of parameters (hoisted out of forward)."""
    def prep_conv(w, b):
        oc, c, k, _ = w.shape
        K = c * k * k                           # kept unpadded (full-dim BlockSpec)
        oc_pad = _round_up(oc, 8)               # sublane-aligned output channels
        w2 = jnp.pad(w.reshape(oc, K), ((0, oc_pad - oc), (0, 0))).astype(jnp.bfloat16)
        b2 = jnp.pad(b.reshape(oc, 1), ((0, oc_pad - oc), (0, 0)))        # f32
        return w2, b2

    def prep_fc(w, b, pad_k):
        n, k = w.shape
        n_pad = _round_up(n, 128)
        k_pad = _round_up(k, 128) if pad_k else k
        wt = jnp.pad(w.T, ((0, k_pad - k), (0, n_pad - n))).astype(jnp.bfloat16)
        bt = jnp.pad(b.reshape(1, n), ((0, 0), (0, n_pad - n)))           # f32
        return wt, bt

    c1w, c1b = prep_conv(p["conv1_w"], p["conv1_b"])
    c2w, c2b = prep_conv(p["conv2_w"], p["conv2_b"])
    f1w, f1b = prep_fc(p["fc1_w"], p["fc1_b"], pad_k=False)   # K=400 unpadded
    f2w, f2b = prep_fc(p["fc2_w"], p["fc2_b"], pad_k=True)    # K padded to match fc1's 128-wide output
    f3w, f3b = prep_fc(p["fc3_w"], p["fc3_b"], pad_k=True)
    return {
        "conv1_w": c1w, "conv1_b": c1b,
        "conv2_w": c2w, "conv2_b": c2b,
        "fc1_w": f1w, "fc1_b": f1b,
        "fc2_w": f2w, "fc2_b": f2b,
        "fc3_w": f3w, "fc3_b": f3b,
    }


# ----------------------------- forward pass -----------------------------

def lenet5a_forward(params, x):
    """params: output of prepare_params().  x: [B, 3, 32, 32] float32 (NCHW)."""
    B = x.shape[0]
    h = jnp.transpose(x, (1, 0, 2, 3))                               # CNHW [3, B, 32, 32]
    h = conv2d_relu_cnhw(h, params["conv1_w"], params["conv1_b"],
                         oc=6, k=5)                                  # [6, B, 28, 28] bf16
    h = avgpool2x2(h)                                                # [6, B, 14, 14]
    h = conv2d_relu_cnhw(h, params["conv2_w"], params["conv2_b"],
                         oc=16, k=5)                                 # [16, B, 10, 10] bf16
    h = avgpool2x2(h)                                                # [16, B, 5, 5]
    h = jnp.transpose(h, (1, 0, 2, 3)).reshape(B, 16 * 5 * 5)        # [B, 400] (torch view order)
    out = mlp_fused(h, params["fc1_w"], params["fc1_b"],
                    params["fc2_w"], params["fc2_b"],
                    params["fc3_w"], params["fc3_b"])                # [B_pad, 128] f32
    return out[:B, :10]


if __name__ == "__main__":
    key = jax.random.PRNGKey(0)
    pkey, xkey = jax.random.split(key)

    raw_params = init_lenet5a_params(pkey)
    params = prepare_params(raw_params)       # one-time weight layout prep

    # LeNet-5 input: batch=2, 3 channels, 32x32 (required for the 16*5*5 flatten)
    x = jax.random.normal(xkey, (2, 3, 32, 32), jnp.float32)

    fwd = jax.jit(lenet5a_forward)
    out = jax.block_until_ready(fwd(params, x))

    assert out.shape == (2, 10), out.shape
    assert out.dtype == jnp.float32
    assert bool(jnp.all(jnp.isfinite(out)))
    print("KERNEL_OK")
</pallas_src>

<mosaic_0001>
module attributes {stable_mosaic.version = 11 : i64} {
  func.func @_conv_bias_relu_kernel(%arg0: i32, %arg1: memref<8x75xbf16, #tpu.memory_space<vmem>>, %arg2: memref<75x896xbf16, #tpu.memory_space<vmem>>, %arg3: memref<8x1xf32, #tpu.memory_space<vmem>>, %arg4: memref<8x896xbf16, #tpu.memory_space<vmem>>) attributes {dimension_semantics = [#tpu.dimension_semantics<parallel>], iteration_bounds = array<i64: 2>, scalar_prefetch = 0 : i64, scratch_operands = 0 : i64, tpu.core_type = #tpu.core_type<tc>, window_params = [{pipeline_mode = #tpu.pipeline_mode<synchronous>, transform_indices = @transform_0, window_bounds = array<i64: 8, 75>}, {transform_indices = @transform_1, window_bounds = array<i64: 75, 896>}, {pipeline_mode = #tpu.pipeline_mode<synchronous>, transform_indices = @transform_2, window_bounds = array<i64: 8, 1>}, {transform_indices = @transform_3, window_bounds = array<i64: 8, 896>}]} {
    %c0 = arith.constant 0 : index
    %c0_0 = arith.constant 0 : index
    %0 = vector.load %arg1[%c0, %c0_0] : memref<8x75xbf16, #tpu.memory_space<vmem>>, vector<8x75xbf16>
    %c0_1 = arith.constant 0 : index
    %c0_2 = arith.constant 0 : index
    %1 = vector.load %arg2[%c0_1, %c0_2] : memref<75x896xbf16, #tpu.memory_space<vmem>>, vector<75x896xbf16>
    %cst = arith.constant dense<0.000000e+00> : vector<8x896xf32>
    %2 = tpu.matmul %0, %1, %cst {dimension_numbers = #tpu.dot_dimension_numbers<[1], [0], [0], [1], [0, 0, 1, 1], [], []>} : vector<8x75xbf16>, vector<75x896xbf16>, vector<8x896xf32> -> vector<8x896xf32>
    %c0_3 = arith.constant 0 : index
    %c0_4 = arith.constant 0 : index
    %3 = vector.load %arg3[%c0_3, %c0_4] : memref<8x1xf32, #tpu.memory_space<vmem>>, vector<8x1xf32>
    %4 = vector.broadcast %3 : vector<8x1xf32> to vector<8x896xf32>
    %5 = arith.addf %2, %4 : vector<8x896xf32>
    %cst_5 = arith.constant 0.000000e+00 : f32
    %6 = vector.broadcast %cst_5 : f32 to vector<8x896xf32>
    %7 = arith.maximumf %5, %6 : vector<8x896xf32>
    %8 = arith.truncf %7 : vector<8x896xf32> to vector<8x896xbf16>
    %c0_6 = arith.constant 0 : index
    %c0_7 = arith.constant 0 : index
    %9 = vector.load %arg4[%c0_6, %c0_7] : memref<8x896xbf16, #tpu.memory_space<vmem>>, vector<8x896xbf16>
    tpu.vector_store %arg4[%c0_6, %c0_7], %8 {strides = array<i32>} : memref<8x896xbf16, #tpu.memory_space<vmem>>, vector<8x896xbf16>,
    return
  }
  func.func @transform_0(%arg0: i32) -> (i32, i32) {
    %c0_i32 = arith.constant 0 : i32
    %c0_i32_0 = arith.constant 0 : i32
    %c0_i32_1 = arith.constant 0 : i32
    return %c0_i32, %c0_i32_0 : i32, i32
  }
  func.func @transform_1(%arg0: i32) -> (i32, i32) {
    %c0_i32 = arith.constant 0 : i32
    %c0_i32_0 = arith.constant 0 : i32
    return %c0_i32, %arg0 : i32, i32
  }
  func.func @transform_2(%arg0: i32) -> (i32, i32) {
    %c0_i32 = arith.constant 0 : i32
    %c0_i32_0 = arith.constant 0 : i32
    %c0_i32_1 = arith.constant 0 : i32
    return %c0_i32, %c0_i32_0 : i32, i32
  }
  func.func @transform_3(%arg0: i32) -> (i32, i32) {
    %c0_i32 = arith.constant 0 : i32
    %c0_i32_0 = arith.constant 0 : i32
    return %c0_i32, %arg0 : i32, i32
  }
}

module attributes {stable_mosaic.version = 11 : i64} {
  func.func @_conv_bias_relu_kernel(%arg0: i32, %arg1: memref<16x150xbf16, #tpu.memory_space<vmem>>, %arg2: memref<150x128xbf16, #tpu.memory_space<vmem>>, %arg3: memref<16x1xf32, #tpu.memory_space<vmem>>, %arg4: memref<16x128xbf16, #tpu.memory_space<vmem>>) attributes {dimension_semantics = [#tpu.dimension_semantics<parallel>], iteration_bounds = array<i64: 2>, scalar_prefetch = 0 : i64, scratch_operands = 0 : i64, tpu.core_type = #tpu.core_type<tc>, window_params = [{pipeline_mode = #tpu.pipeline_mode<synchronous>, transform_indices = @transform_0, window_bounds = array<i64: 16, 150>}, {transform_indices = @transform_1, window_bounds = array<i64: 150, 128>}, {pipeline_mode = #tpu.pipeline_mode<synchronous>, transform_indices = @transform_2, window_bounds = array<i64: 16, 1>}, {transform_indices = @transform_3, window_bounds = array<i64: 16, 128>}]} {
    %c0 = arith.constant 0 : index
    %c0_0 = arith.constant 0 : index
    %0 = vector.load %arg1[%c0, %c0_0] : memref<16x150xbf16, #tpu.memory_space<vmem>>, vector<16x150xbf16>
    %c0_1 = arith.constant 0 : index
    %c0_2 = arith.constant 0 : index
    %1 = vector.load %arg2[%c0_1, %c0_2] : memref<150x128xbf16, #tpu.memory_space<vmem>>, vector<150x128xbf16>
    %cst = arith.constant dense<0.000000e+00> : vector<16x128xf32>
    %2 = tpu.matmul %0, %1, %cst {dimension_numbers = #tpu.dot_dimension_numbers<[1], [0], [0], [1], [0, 0, 1, 1], [], []>} : vector<16x150xbf16>, vector<150x128xbf16>, vector<16x128xf32> -> vector<16x128xf32>
    %c0_3 = arith.constant 0 : index
    %c0_4 = arith.constant 0 : index
    %3 = vector.load %arg3[%c0_3, %c0_4] : memref<16x1xf32, #tpu.memory_space<vmem>>, vector<16x1xf32>
    %4 = vector.broadcast %3 : vector<16x1xf32> to vector<16x128xf32>
    %5 = arith.addf %2, %4 : vector<16x128xf32>
    %cst_5 = arith.constant 0.000000e+00 : f32
    %6 = vector.broadcast %cst_5 : f32 to vector<16x128xf32>
    %7 = arith.maximumf %5, %6 : vector<16x128xf32>
    %8 = arith.truncf %7 : vector<16x128xf32> to vector<16x128xbf16>
    %c0_6 = arith.constant 0 : index
    %c0_7 = arith.constant 0 : index
    %9 = vector.load %arg4[%c0_6, %c0_7] : memref<16x128xbf16, #tpu.memory_space<vmem>>, vector<16x128xbf16>
    tpu.vector_store %arg4[%c0_6, %c0_7], %8 {strides = array<i32>} : memref<16x128xbf16, #tpu.memory_space<vmem>>, vector<16x128xbf16>,
    return
  }
  func.func @transform_0(%arg0: i32) -> (i32, i32) {
    %c0_i32 = arith.constant 0 : i32
    %c0_i32_0 = arith.constant 0 : i32
    %c0_i32_1 = arith.constant 0 : i32
    return %c0_i32, %c0_i32_0 : i32, i32
  }
  func.func @transform_1(%arg0: i32) -> (i32, i32) {
    %c0_i32 = arith.constant 0 : i32
    %c0_i32_0 = arith.constant 0 : i32
    return %c0_i32, %arg0 : i32, i32
  }
  func.func @transform_2(%arg0: i32) -> (i32, i32) {
    %c0_i32 = arith.constant 0 : i32
    %c0_i32_0 = arith.constant 0 : i32
    %c0_i32_1 = arith.constant 0 : i32
    return %c0_i32, %c0_i32_0 : i32, i32
  }
  func.func @transform_3(%arg0: i32) -> (i32, i32) {
    %c0_i32 = arith.constant 0 : i32
    %c0_i32_0 = arith.constant 0 : i32
    return %c0_i32, %arg0 : i32, i32
  }
}

module attributes {stable_mosaic.version = 11 : i64} {
  func.func @_mlp_kernel(%arg0: i32, %arg1: memref<16x400xbf16, #tpu.memory_space<vmem>>, %arg2: memref<400x128xbf16, #tpu.memory_space<vmem>>, %arg3: memref<1x128xf32, #tpu.memory_space<vmem>>, %arg4: memref<128x128xbf16, #tpu.memory_space<vmem>>, %arg5: memref<1x128xf32, #tpu.memory_space<vmem>>, %arg6: memref<128x128xbf16, #tpu.memory_space<vmem>>, %arg7: memref<1x128xf32, #tpu.memory_space<vmem>>, %arg8: memref<16x128xf32, #tpu.memory_space<vmem>>) attributes {dimension_semantics = [#tpu.dimension_semantics<parallel>], iteration_bounds = array<i64: 1>, scalar_prefetch = 0 : i64, scratch_operands = 0 : i64, tpu.core_type = #tpu.core_type<tc>, window_params = [{transform_indices = @transform_0, window_bounds = array<i64: 16, 400>}, {pipeline_mode = #tpu.pipeline_mode<synchronous>, transform_indices = @transform_1, window_bounds = array<i64: 400, 128>}, {pipeline_mode = #tpu.pipeline_mode<synchronous>, transform_indices = @transform_2, window_bounds = array<i64: 1, 128>}, {pipeline_mode = #tpu.pipeline_mode<synchronous>, transform_indices = @transform_3, window_bounds = array<i64: 128, 128>}, {pipeline_mode = #tpu.pipeline_mode<synchronous>, transform_indices = @transform_4, window_bounds = array<i64: 1, 128>}, {pipeline_mode = #tpu.pipeline_mode<synchronous>, transform_indices = @transform_5, window_bounds = array<i64: 128, 128>}, {pipeline_mode = #tpu.pipeline_mode<synchronous>, transform_indices = @transform_6, window_bounds = array<i64: 1, 128>}, {transform_indices = @transform_7, window_bounds = array<i64: 16, 128>}]} {
    %c0 = arith.constant 0 : index
    %c0_0 = arith.constant 0 : index
    %0 = vector.load %arg1[%c0, %c0_0] : memref<16x400xbf16, #tpu.memory_space<vmem>>, vector<16x400xbf16>
    %c0_1 = arith.constant 0 : index
    %c0_2 = arith.constant 0 : index
    %1 = vector.load %arg2[%c0_1, %c0_2] : memref<400x128xbf16, #tpu.memory_space<vmem>>, vector<400x128xbf16>
    %cst = arith.constant dense<0.000000e+00> : vector<16x128xf32>
    %2 = tpu.matmul %0, %1, %cst {dimension_numbers = #tpu.dot_dimension_numbers<[1], [0], [0], [1], [0, 0, 1, 1], [], []>} : vector<16x400xbf16>, vector<400x128xbf16>, vector<16x128xf32> -> vector<16x128xf32>
    %c0_3 = arith.constant 0 : index
    %c0_4 = arith.constant 0 : index
    %3 = vector.load %arg3[%c0_3, %c0_4] : memref<1x128xf32, #tpu.memory_space<vmem>>, vector<1x128xf32>
    %4 = vector.broadcast %3 : vector<1x128xf32> to vector<16x128xf32>
    %5 = arith.addf %2, %4 : vector<16x128xf32>
    %cst_5 = arith.constant 0.000000e+00 : f32
    %6 = vector.broadcast %cst_5 : f32 to vector<16x128xf32>
    %7 = arith.maximumf %5, %6 : vector<16x128xf32>
    %8 = arith.truncf %7 : vector<16x128xf32> to vector<16x128xbf16>
    %c0_6 = arith.constant 0 : index
    %c0_7 = arith.constant 0 : index
    %9 = vector.load %arg4[%c0_6, %c0_7] : memref<128x128xbf16, #tpu.memory_space<vmem>>, vector<128x128xbf16>
    %cst_8 = arith.constant dense<0.000000e+00> : vector<16x128xf32>
    %10 = tpu.matmul %8, %9, %cst_8 {dimension_numbers = #tpu.dot_dimension_numbers<[1], [0], [0], [1], [0, 0, 1, 1], [], []>} : vector<16x128xbf16>, vector<128x128xbf16>, vector<16x128xf32> -> vector<16x128xf32>
    %c0_9 = arith.constant 0 : index
    %c0_10 = arith.constant 0 : index
    %11 = vector.load %arg5[%c0_9, %c0_10] : memref<1x128xf32, #tpu.memory_space<vmem>>, vector<1x128xf32>
    %12 = vector.broadcast %11 : vector<1x128xf32> to vector<16x128xf32>
    %13 = arith.addf %10, %12 : vector<16x128xf32>
    %cst_11 = arith.constant 0.000000e+00 : f32
    %14 = vector.broadcast %cst_11 : f32 to vector<16x128xf32>
    %15 = arith.maximumf %13, %14 : vector<16x128xf32>
    %16 = arith.truncf %15 : vector<16x128xf32> to vector<16x128xbf16>
    %c0_12 = arith.constant 0 : index
    %c0_13 = arith.constant 0 : index
    %17 = vector.load %arg6[%c0_12, %c0_13] : memref<128x128xbf16, #tpu.memory_space<vmem>>, vector<128x128xbf16>
    %cst_14 = arith.constant dense<0.000000e+00> : vector<16x128xf32>
    %18 = tpu.matmul %16, %17, %cst_14 {dimension_numbers = #tpu.dot_dimension_numbers<[1], [0], [0], [1], [0, 0, 1, 1], [], []>} : vector<16x128xbf16>, vector<128x128xbf16>, vector<16x128xf32> -> vector<16x128xf32>
    %c0_15 = arith.constant 0 : index
    %c0_16 = arith.constant 0 : index
    %19 = vector.load %arg7[%c0_15, %c0_16] : memref<1x128xf32, #tpu.memory_space<vmem>>, vector<1x128xf32>
    %20 = vector.broadcast %19 : vector<1x128xf32> to vector<16x128xf32>
    %21 = arith.addf %18, %20 : vector<16x128xf32>
    %c0_17 = arith.constant 0 : index
    %c0_18 = arith.constant 0 : index
    %22 = vector.load %arg8[%c0_17, %c0_18] : memref<16x128xf32, #tpu.memory_space<vmem>>, vector<16x128xf32>
    tpu.vector_store %arg8[%c0_17, %c0_18], %21 {strides = array<i32>} : memref<16x128xf32, #tpu.memory_space<vmem>>, vector<16x128xf32>,
    return
  }
  func.func @transform_0(%arg0: i32) -> (i32, i32) {
    %c0_i32 = arith.constant 0 : i32
    %c0_i32_0 = arith.constant 0 : i32
    return %arg0, %c0_i32 : i32, i32
  }
  func.func @transform_1(%arg0: i32) -> (i32, i32) {
    %c0_i32 = arith.constant 0 : i32
    %c0_i32_0 = arith.constant 0 : i32
    %c0_i32_1 = arith.constant 0 : i32
    return %c0_i32, %c0_i32_0 : i32, i32
  }
  func.func @transform_2(%arg0: i32) -> (i32, i32) {
    %c0_i32 = arith.constant 0 : i32
    %c0_i32_0 = arith.constant 0 : i32
    %c0_i32_1 = arith.constant 0 : i32
    return %c0_i32, %c0_i32_0 : i32, i32
  }
  func.func @transform_3(%arg0: i32) -> (i32, i32) {
    %c0_i32 = arith.constant 0 : i32
    %c0_i32_0 = arith.constant 0 : i32
    %c0_i32_1 = arith.constant 0 : i32
    return %c0_i32, %c0_i32_0 : i32, i32
  }
  func.func @transform_4(%arg0: i32) -> (i32, i32) {
    %c0_i32 = arith.constant 0 : i32
    %c0_i32_0 = arith.constant 0 : i32
    %c0_i32_1 = arith.constant 0 : i32
    return %c0_i32, %c0_i32_0 : i32, i32
  }
  func.func @transform_5(%arg0: i32) -> (i32, i32) {
    %c0_i32 = arith.constant 0 : i32
    %c0_i32_0 = arith.constant 0 : i32
    %c0_i32_1 = arith.constant 0 : i32
    return %c0_i32, %c0_i32_0 : i32, i32
  }
  func.func @transform_6(%arg0: i32) -> (i32, i32) {
    %c0_i32 = arith.constant 0 : i32
    %c0_i32_0 = arith.constant 0 : i32
    %c0_i32_1 = arith.constant 0 : i32
    return %c0_i32, %c0_i32_0 : i32, i32
  }
  func.func @transform_7(%arg0: i32) -> (i32, i32) {
    %c0_i32 = arith.constant 0 : i32
    %c0_i32_0 = arith.constant 0 : i32
    return %arg0, %c0_i32 : i32, i32
  }
}

</mosaic_0001>

<llo_original>
// kernel: lenet5a_forward.3
$region0: #{lenet5a_forward.3}
  #allocation0 [shape = 'u32[]', space=smem, size = 0x4, offset = 0x4, fixed_abs, tag = 'smem constant byte address 0x4 - core index']
  #allocation1 [shape = 'u32[144,128]{1,0:T(1,128)}', space=vmem, size = 0x12000, scoped, tag = 'internal scratch']
  %s0 = inlined_call_operand.vmem [shape: bf16[8,75], index: 0, kind: input, shape index: {}]
  %s1 = inlined_call_operand.vmem [shape: bf16[75,1792], index: 1, kind: input, shape index: {}]
  %s2 = inlined_call_operand.vmem [shape: f32[8,1], index: 2, kind: input, shape index: {}]
  %s3 = inlined_call_operand.vmem [shape: bf16[8,1792], index: 3, kind: output, shape index: {}]
  %s4 = sld [smem:[#allocation0]]
  $region71: #{lenet5a_forward.3} parent=0
    _
  %s6 = ssub.s32 1, %s4
  %s7 = scalar_select 0, %s6, %s4
  $region1: #{lenet5a_forward.3} parent=0
    #allocation2 [shape = 'u8[286720]{0}', space=vmem, size = 0x46000, scoped, tag = 'input window, operand 1']
    loop: start=0, step=1, limit=4
    $region2: #{lenet5a_forward.3} parent=1 // loop_pre_header
      _
    $region3: #{lenet5a_forward.3} parent=1 // loop_header
      %s9 = sphi 0, %s13
      %p10 = scmp.ge.s32.totalorder %s9, 4
      %s17 = sphi 0, %s17
      %s19 = sphi 0, %s17
      %s20 = sphi 0, %s19
      %s34 = sphi 0, %s20
      %s40 = sphi 0, %s42
      %s43 = sphi 0, %s40
      %s44 = sphi 0, %s43
      %s60 = sphi 0, %s44
      %s64 = sphi 0, %s64
      %s66 = sphi 0, %s64
      %s67 = sphi 0, %s66
      %s81 = sphi 0, %s67
      %s87 = sphi 0, %s89
      %s90 = sphi 0, %s87
      %s91 = sphi 0, %s90
      %s107 = sphi 0, %s91
    $region4: #{lenet5a_forward.3} parent=1 // loop_header_branch
      %12 = sbr.rel (%p10) target = $region8
    $region5: #{lenet5a_forward.3} parent=1 // loop_body
      %s14 = ssub.s32 %s9, 1
      %s15 = ssub.s32 %s9, 2
      %s16 = sadd.s32 %s9, 1
      %s18 = sadd.s32 %s17, 1
      %p21 = scmp.eq.s32.totalorder %s9, 1
      %p22 = scmp.ne.s32.totalorder %s17, %s19
      %p23 = scmp.eq.s32.totalorder %s9, 0
      %p24 = por %p22, %p23
      %p25 = scmp.ne.s32.totalorder %s17, %s19
      %p26 = scmp.eq.s32.totalorder %s14, 1
      %p27 = por %p25, %p26
      %p28 = scmp.ne.s32.totalorder %s19, %s20
      %p29 = scmp.eq.s32.totalorder %s14, 0
      %p30 = por %p28, %p29
      %p31 = scmp.ne.s32.totalorder %s19, %s20
      %p32 = scmp.eq.s32.totalorder %s15, 1
      %p33 = por %p31, %p32
      %p35 = scmp.ne.s32.totalorder %s20, %s34
      %p36 = scmp.eq.s32.totalorder %s15, 0
      %p37 = por %p35, %p36
      %s38 = ssub.s32 %s9, %s16
      %p39 = scmp.eq.s32.totalorder %s38, 0
      %s41 = sadd.s32 %s40, 1
      %s42 = scalar_select %p39, %s40, %s41
      %p45 = pneg %p39
      %p46 = scmp.eq.s32.totalorder %s9, 1
      %p47 = por %p45, %p46
      %p48 = scmp.ne.s32.totalorder %s40, %s43
      %p49 = scmp.eq.s32.totalorder %s9, 0
      %p50 = por %p48, %p49
      %p51 = scmp.ne.s32.totalorder %s40, %s43
      %p52 = scmp.eq.s32.totalorder %s14, 1
      %p53 = por %p51, %p52
      %p54 = scmp.ne.s32.totalorder %s43, %s44
      %p55 = scmp.eq.s32.totalorder %s14, 0
      %p56 = por %p54, %p55
      %p57 = scmp.ne.s32.totalorder %s43, %s44
      %p58 = scmp.eq.s32.totalorder %s15, 1
      %p59 = por %p57, %p58
      %p61 = scmp.ne.s32.totalorder %s44, %s60
      %p62 = scmp.eq.s32.totalorder %s15, 0
      %p63 = por %p61, %p62
      %s65 = sadd.s32 %s64, 1
      %p68 = scmp.eq.s32.totalorder %s9, 1
      %p69 = scmp.ne.s32.totalorder %s64, %s66
      %p70 = scmp.eq.s32.totalorder %s9, 0
      %p71 = por %p69, %p70
      %p72 = scmp.ne.s32.totalorder %s64, %s66
      %p73 = scmp.eq.s32.totalorder %s14, 1
      %p74 = por %p72, %p73
      %p75 = scmp.ne.s32.totalorder %s66, %s67
      %p76 = scmp.eq.s32.totalorder %s14, 0
      %p77 = por %p75, %p76
      %p78 = scmp.ne.s32.totalorder %s66, %s67
      %p79 = scmp.eq.s32.totalorder %s15, 1
      %p80 = por %p78, %p79
      %p82 = scmp.ne.s32.totalorder %s67, %s81
      %p83 = scmp.eq.s32.totalorder %s15, 0
      %p84 = por %p82, %p83
      %s85 = ssub.s32 %s9, %s16
      %p86 = scmp.eq.s32.totalorder %s85, 0
      %s88 = sadd.s32 %s87, 1
      %s89 = scalar_select %p86, %s87, %s88
      %p92 = pneg %p86
      %p93 = scmp.eq.s32.totalorder %s9, 1
      %p94 = por %p92, %p93
      %p95 = scmp.ne.s32.totalorder %s87, %s90
      %p96 = scmp.eq.s32.totalorder %s9, 0
      %p97 = por %p95, %p96
      %p98 = scmp.ne.s32.totalorder %s87, %s90
      %p99 = scmp.eq.s32.totalorder %s14, 1
      %p100 = por %p98, %p99
      %p101 = scmp.ne.s32.totalorder %s90, %s91
      %p102 = scmp.eq.s32.totalorder %s14, 0
      %p103 = por %p101, %p102
      %p104 = scmp.ne.s32.totalorder %s90, %s91
      %p105 = scmp.eq.s32.totalorder %s15, 1
      %p106 = por %p104, %p105
      %p108 = scmp.ne.s32.totalorder %s91, %s107
      %p109 = scmp.eq.s32.totalorder %s15, 0
      %p110 = por %p108, %p109
      %p111 = scmp.le.s32.totalorder 1, %s9
      %p112 = scmp.lt.s32.totalorder %s9, 3
      %p113 = pnand %p111, %p112
      %p114 = pneg %p113
      // Predicated region
      $region9: #{lenet5a_forward.3} parent=5 // pred_check
        _
      $region10: #{lenet5a_forward.3} parent=5 // pred_check_branch
        %116 = sbr.rel (%p113) target = $region12
      $region11: #{lenet5a_forward.3} parent=5 // pred_region
        %s117 = ssub.s32 %s9, 1
        // Predicated region
        $region13: #{lenet5a_forward.3} parent=11 // pred_check
          %p118 = pneg %p30
        $region14: #{lenet5a_forward.3} parent=11 // pred_check_branch
          %120 = sbr.rel (%p118) target = $region16
        $region15: #{lenet5a_forward.3} parent=11 // pred_region
          _
        $region16: #{lenet5a_forward.3} parent=11 // pred_fallthru
          _
        // Predicated region
        $region17: #{lenet5a_forward.3} parent=11 // pred_check
          %p121 = pneg %p77
        $region18: #{lenet5a_forward.3} parent=11 // pred_check_branch
          %123 = sbr.rel (%p121) target = $region20
        $region19: #{lenet5a_forward.3} parent=11 // pred_region
          _
        $region20: #{lenet5a_forward.3} parent=11 // pred_fallthru
          _
      $region12: #{lenet5a_forward.3} parent=5 // pred_fallthru
        _
      %p124 = scmp.lt.s32.totalorder %s9, 2
      // Predicated region
      $region21: #{lenet5a_forward.3} parent=5 // pred_check
        %p125 = pneg %p124
      $region22: #{lenet5a_forward.3} parent=5 // pred_check_branch
        %127 = sbr.rel (%p125) target = $region24
      $region23: #{lenet5a_forward.3} parent=5 // pred_region
        // Predicated region
        $region25: #{lenet5a_forward.3} parent=23 // pred_check
          %p128 = pneg %p50
        $region26: #{lenet5a_forward.3} parent=23 // pred_check_branch
          %130 = sbr.rel (%p128) target = $region28
        $region27: #{lenet5a_forward.3} parent=23 // pred_region
          %s131 = sand.u32 %s40, 1
          %s132 = sand.u32 %s40, 1
          %s133 = smul.addr %s132, 280
          %s134 = scalar_lea.vmem [#allocation2], %s133
          %s135 = smul.u32 7, %s9
          %s136 = smul.addr %s135, 4
          %s137 = scalar_lea.vmem %s1, %s136
          // Predicated region
          $region29: #{lenet5a_forward.3} parent=27 // pred_check
            _
          $region30: #{lenet5a_forward.3} parent=27 // pred_check_branch
            %139 = sbr.rel (0) target = $region32
          $region31: #{lenet5a_forward.3} parent=27 // pred_region
            // Predicated region
            $region33: #{lenet5a_forward.3} parent=31 // pred_check
              _
            $region34: #{lenet5a_forward.3} parent=31 // pred_check_branch
              %141 = sbr.rel (0) target = $region36
            $region35: #{lenet5a_forward.3} parent=31 // pred_region
              %s142 = scalar_lea.vmem %s137, 24
              %s143 = scalar_lea.vmem %s134, 24 [#allocation2]
              loop: start=0, step=1, limit=1
              $region37: #{lenet5a_forward.3} parent=35 // loop_pre_header
                _
              $region38: #{lenet5a_forward.3} parent=35 // loop_header
                %s145 = sphi 0, %s149
                %p146 = scmp.ge.s32.totalorder %s145, 1
                %s150 = sphi %s137, %s137
                %s151 = sphi %s134, %s134
              $region39: #{lenet5a_forward.3} parent=35 // loop_header_branch
                %148 = sbr.rel (%p146) target = $region43
              $region40: #{lenet5a_forward.3} parent=35 // loop_body
                %v152 = vld [vmem:[%s150] sm:$0xff]
                %153 = vst [vmem:[%s151] sm:$0xff] %v152
                %v154 = vld [vmem:[%s150 + $0x8] sm:$0xff]
                %155 = vst [vmem:[%s151 + $0x8] sm:$0xff] %v154
                %v156 = vld [vmem:[%s150 + $0x10] sm:$0xff]
                %157 = vst [vmem:[%s151 + $0x10] sm:$0xff] %v156
                %v158 = vld [vmem:[%s150 + $0x38] sm:$0xff]
                %159 = vst [vmem:[%s151 + $0x1c] sm:$0xff] %v158
                %v160 = vld [vmem:[%s150 + $0x40] sm:$0xff]
                %161 = vst [vmem:[%s151 + $0x24] sm:$0xff] %v160
                %v162 = vld [vmem:[%s150 + $0x48] sm:$0xff]
                %163 = vst [vmem:[%s151 + $0x2c] sm:$0xff] %v162
                %v164 = vld [vmem:[%s150 + $0x70] sm:$0xff]
                %165 = vst [vmem:[%s151 + $0x38] sm:$0xff] %v164
                %v166 = vld [vmem:[%s150 + $0x78] sm:$0xff]
                %167 = vst [vmem:[%s151 + $0x40] sm:$0xff] %v166
                %v168 = vld [vmem:[%s150 + $0x80] sm:$0xff]
                %169 = vst [vmem:[%s151 + $0x48] sm:$0xff] %v168
                %v170 = vld [vmem:[%s150 + $0xa8] sm:$0xff]
                %171 = vst [vmem:[%s151 + $0x54] sm:$0xff] %v170
                %v172 = vld [vmem:[%s150 + $0xb0] sm:$0xff]
                %173 = vst [vmem:[%s151 + $0x5c] sm:$0xff] %v172
                %v174 = vld [vmem:[%s150 + $0xb8] sm:$0xff]
                %175 = vst [vmem:[%s151 + $0x64] sm:$0xff] %v174
                %v176 = vld [vmem:[%s150 + $0xe0] sm:$0xff]
                %177 = vst [vmem:[%s151 + $0x70] sm:$0xff] %v176
                %v178 = vld [vmem:[%s150 + $0xe8] sm:$0xff]
                %179 = vst [vmem:[%s151 + $0x78] sm:$0xff] %v178
                %v180 = vld [vmem:[%s150 + $0xf0] sm:$0xff]
                %181 = vst [vmem:[%s151 + $0x80] sm:$0xff] %v180
                %v182 = vld [vmem:[%s150 + $0x118] sm:$0xff]
                %183 = vst [vmem:[%s151 + $0x8c] sm:$0xff] %v182
                %v184 = vld [vmem:[%s150 + $0x120] sm:$0xff]
                %185 = vst [vmem:[%s151 + $0x94] sm:$0xff] %v184
                %v186 = vld [vmem:[%s150 + $0x128] sm:$0xff]
                %187 = vst [vmem:[%s151 + $0x9c] sm:$0xff] %v186
                %v188 = vld [vmem:[%s150 + $0x150] sm:$0xff]
                %189 = vst [vmem:[%s151 + $0xa8] sm:$0xff] %v188
                %v190 = vld [vmem:[%s150 + $0x158] sm:$0xff]
                %191 = vst [vmem:[%s151 + $0xb0] sm:$0xff] %v190
                %v192 = vld [vmem:[%s150 + $0x160] sm:$0xff]
                %193 = vst [vmem:[%s151 + $0xb8] sm:$0xff] %v192
                %v194 = vld [vmem:[%s150 + $0x188] sm:$0xff]
                %195 = vst [vmem:[%s151 + $0xc4] sm:$0xff] %v194
                %v196 = vld [vmem:[%s150 + $0x190] sm:$0xff]
                %197 = vst [vmem:[%s151 + $0xcc] sm:$0xff] %v196
                %v198 = vld [vmem:[%s150 + $0x198] sm:$0xff]
                %199 = vst [vmem:[%s151 + $0xd4] sm:$0xff] %v198
                %v200 = vld [vmem:[%s150 + $0x1c0] sm:$0xff]
                %201 = vst [vmem:[%s151 + $0xe0] sm:$0xff] %v200
                %v202 = vld [vmem:[%s150 + $0x1c8] sm:$0xff]
                %203 = vst [vmem:[%s151 + $0xe8] sm:$0xff] %v202
                %v204 = vld [vmem:[%s150 + $0x1d0] sm:$0xff]
                %205 = vst [vmem:[%s151 + $0xf0] sm:$0xff] %v204
                %v206 = vld [vmem:[%s150 + $0x1f8] sm:$0xff]
                %207 = vst [vmem:[%s151 + $0xfc] sm:$0xff] %v206
                %v208 = vld [vmem:[%s150 + $0x200] sm:$0xff]
                %209 = vst [vmem:[%s151 + $0x104] sm:$0xff] %v208
                %v210 = vld [vmem:[%s150 + $0x208] sm:$0xff]
                %211 = vst [vmem:[%s151 + $0x10c] sm:$0xff] %v210
              $region41: #{lenet5a_forward.3} parent=35 // loop_footer
                %s149 = sadd.s32 1, %s145
              $region42: #{lenet5a_forward.3} parent=35 // loop_footer_branch
                %144 = sbr.rel target = $region38
              $region43: #{lenet5a_forward.3} parent=35 // loop_exit
                _
              loop: start=0, step=1, limit=1
              $region44: #{lenet5a_forward.3} parent=35 // loop_pre_header
                _
              $region45: #{lenet5a_forward.3} parent=35 // loop_header
                %s214 = sphi 0, %s218
                %p215 = scmp.ge.s32.totalorder %s214, 1
                %s219 = sphi %s142, %s142
                %s220 = sphi %s143, %s143
              $region46: #{lenet5a_forward.3} parent=35 // loop_header_branch
                %217 = sbr.rel (%p215) target = $region50
              $region47: #{lenet5a_forward.3} parent=35 // loop_body
                %v221 = vld [vmem:[%s219] sm:$0xf]
                %222 = vst [vmem:[%s220] sm:$0xf] %v221
                %v223 = vld [vmem:[%s219 + $0x38] sm:$0xf]
                %224 = vst [vmem:[%s220 + $0x1c] sm:$0xf] %v223
                %v225 = vld [vmem:[%s219 + $0x70] sm:$0xf]
                %226 = vst [vmem:[%s220 + $0x38] sm:$0xf] %v225
                %v227 = vld [vmem:[%s219 + $0xa8] sm:$0xf]
                %228 = vst [vmem:[%s220 + $0x54] sm:$0xf] %v227
                %v229 = vld [vmem:[%s219 + $0xe0] sm:$0xf]
                %230 = vst [vmem:[%s220 + $0x70] sm:$0xf] %v229
                %v231 = vld [vmem:[%s219 + $0x118] sm:$0xf]
                %232 = vst [vmem:[%s220 + $0x8c] sm:$0xf] %v231
                %v233 = vld [vmem:[%s219 + $0x150] sm:$0xf]
                %234 = vst [vmem:[%s220 + $0xa8] sm:$0xf] %v233
                %v235 = vld [vmem:[%s219 + $0x188] sm:$0xf]
                %236 = vst [vmem:[%s220 + $0xc4] sm:$0xf] %v235
                %v237 = vld [vmem:[%s219 + $0x1c0] sm:$0xf]
                %238 = vst [vmem:[%s220 + $0xe0] sm:$0xf] %v237
                %v239 = vld [vmem:[%s219 + $0x1f8] sm:$0xf]
                %240 = vst [vmem:[%s220 + $0xfc] sm:$0xf] %v239
              $region48: #{lenet5a_forward.3} parent=35 // loop_footer
                %s218 = sadd.s32 1, %s214
              $region49: #{lenet5a_forward.3} parent=35 // loop_footer_branch
                %213 = sbr.rel target = $region45
              $region50: #{lenet5a_forward.3} parent=35 // loop_exit
                _
            $region36: #{lenet5a_forward.3} parent=31 // pred_fallthru
              _
          $region32: #{lenet5a_forward.3} parent=27 // pred_fallthru
            _
          %241 = vnop
        $region28: #{lenet5a_forward.3} parent=23 // pred_fallthru
          _
      $region24: #{lenet5a_forward.3} parent=5 // pred_fallthru
        _
      %p242 = scmp.le.s32.totalorder 1, %s9
      %p243 = scmp.lt.s32.totalorder %s9, 3
      %p244 = pnand %p242, %p243
      %p245 = pneg %p244
      // Predicated region
      $region51: #{lenet5a_forward.3} parent=5 // pred_check
        _
      $region52: #{lenet5a_forward.3} parent=5 // pred_check_branch
        %247 = sbr.rel (%p244) target = $region54
      $region53: #{lenet5a_forward.3} parent=5 // pred_region
        %s248 = ssub.s32 %s9, 1
        %s249 = sand.u32 %s43, 1
        %s250 = sand.u32 %s43, 1
        %s251 = smul.addr %s250, 280
        %s252 = scalar_lea.vmem [#allocation2], %s251
        // Predicated region
        $region55: #{lenet5a_forward.3} parent=53 // pred_check
          %p253 = pneg %p56
        $region56: #{lenet5a_forward.3} parent=53 // pred_check_branch
          %255 = sbr.rel (%p253) target = $region58
        $region57: #{lenet5a_forward.3} parent=53 // pred_region
          _
        $region58: #{lenet5a_forward.3} parent=53 // pred_fallthru
          _
        %p256 = pneg %p30
        %p257 = pneg %p27
        %s258 = sand.u32 %s43, 1
        %s259 = sand.u32 %s43, 1
        %s260 = smul.addr %s259, 280
        %s261 = scalar_lea.vmem [#allocation2], %s260
        %p262 = pneg %p56
        %p263 = pneg %p53
        %p264 = pneg %p77
        %p265 = pneg %p74
        %p266 = pneg %p103
        %p267 = pneg %p100
        %s268 = smul.u32 7, %s14
        %p269 = scmp.lt.s32.totalorder %s268, 13
        %s270 = scalar_select %p269, %s268, 13
        %s271 = smul.addr %s270, 4
        %s272 = scalar_lea.vmem %s3, %s271
        %s273 = smul.u32 7, %s14
        %s274 = smul.u32 7, %s14
        %p275 = scmp.lt.s32.totalorder %s274, 13
        %s276 = scalar_select %p275, %s274, 13
        %s277 = smul.addr %s276, 4
        %s278 = scalar_lea.vmem %s3, %s277
        %s279 = smul.u32 7, %s14
        %v281 = vld [vmem:[%s0] sm:$0xf]
        %v282 = vld [vmem:[%s252] sm:$0xff]
        %v283 = vld [vmem:[%s252 + $0x8] sm:$0xff]
        %v284 = vld [vmem:[%s252 + $0x10] sm:$0xff]
        %v285 = vld [vmem:[%s252 + $0x18] sm:$0xf]
        %v286 = vld [vmem:[%s252 + $0x1c] sm:$0xff]
        %v287 = vld [vmem:[%s252 + $0x24] sm:$0xff]
        %v288 = vld [vmem:[%s252 + $0x2c] sm:$0xff]
        %v289 = vld [vmem:[%s252 + $0x34] sm:$0xf]
        %v290 = vld [vmem:[%s252 + $0x38] sm:$0xff]
        %v291 = vld [vmem:[%s252 + $0x40] sm:$0xff]
        %v292 = vld [vmem:[%s252 + $0x48] sm:$0xff]
        %v293 = vld [vmem:[%s252 + $0x50] sm:$0xf]
        %v294 = vld [vmem:[%s252 + $0x54] sm:$0xff]
        %v295 = vld [vmem:[%s252 + $0x5c] sm:$0xff]
        %v296 = vld [vmem:[%s252 + $0x64] sm:$0xff]
        %v297 = vld [vmem:[%s252 + $0x6c] sm:$0xf]
        %v298 = vld [vmem:[%s252 + $0x70] sm:$0xff]
        %v299 = vld [vmem:[%s252 + $0x78] sm:$0xff]
        %v300 = vld [vmem:[%s252 + $0x80] sm:$0xff]
        %v301 = vld [vmem:[%s252 + $0x88] sm:$0xf]
        %v302 = vld [vmem:[%s252 + $0x8c] sm:$0xff]
        %v303 = vld [vmem:[%s252 + $0x94] sm:$0xff]
        %v304 = vld [vmem:[%s252 + $0x9c] sm:$0xff]
        %v305 = vld [vmem:[%s252 + $0xa4] sm:$0xf]
        %v306 = vld [vmem:[%s252 + $0xa8] sm:$0xff]
        %v307 = vld [vmem:[%s252 + $0xb0] sm:$0xff]
        %v308 = vld [vmem:[%s252 + $0xb8] sm:$0xff]
        %v309 = vld [vmem:[%s252 + $0xc0] sm:$0xf]
        %v310 = vld [vmem:[%s252 + $0xc4] sm:$0xff]
        %v311 = vld [vmem:[%s252 + $0xcc] sm:$0xff]
        %v312 = vld [vmem:[%s252 + $0xd4] sm:$0xff]
        %v313 = vld [vmem:[%s252 + $0xdc] sm:$0xf]
        %v314 = vld [vmem:[%s252 + $0xe0] sm:$0xff]
        %v315 = vld [vmem:[%s252 + $0xe8] sm:$0xff]
        %v316 = vld [vmem:[%s252 + $0xf0] sm:$0xff]
        %v317 = vld [vmem:[%s252 + $0xf8] sm:$0xf]
        %v318 = vld [vmem:[%s252 + $0xfc] sm:$0x33]
        %v319 = vld [vmem:[%s252 + $0x104] sm:$0x33]
        %v320 = vld [vmem:[%s252 + $0x10c] sm:$0x33]
        %v321 = vld [vmem:[%s252 + $0x114] sm:$0x3]
        %v322 = vld [vmem:[%s2] sm:$0xff]
        %324 = vset.pattern.permute.xlu0 0
        %325 = vperm.xlu0 %324, %v322
        %v326 = vpop.permute.xlu0 %325
        %v368 = vunpack.c.l.b16 %v282
        %v369 = vunpack.c.h.b16 %v282
        %v370 = vunpack.c.l.b16 %v283
        %v371 = vunpack.c.h.b16 %v283
        %v372 = vunpack.c.l.b16 %v284
        %v373 = vunpack.c.h.b16 %v284
        %v374 = vunpack.c.l.b16 %v285
        %v375 = vunpack.c.l.b16 %v286
        %v376 = vunpack.c.h.b16 %v286
        %v377 = vunpack.c.l.b16 %v287
        %v378 = vunpack.c.h.b16 %v287
        %v379 = vunpack.c.l.b16 %v288
        %v380 = vunpack.c.h.b16 %v288
        %v381 = vunpack.c.l.b16 %v289
        %v382 = vunpack.c.l.b16 %v290
        %v383 = vunpack.c.h.b16 %v290
        %v384 = vunpack.c.l.b16 %v291
        %v385 = vunpack.c.h.b16 %v291
        %v386 = vunpack.c.l.b16 %v292
        %v387 = vunpack.c.h.b16 %v292
        %v388 = vunpack.c.l.b16 %v293
        %v389 = vunpack.c.l.b16 %v294
        %v390 = vunpack.c.h.b16 %v294
        %v391 = vunpack.c.l.b16 %v295
        %v392 = vunpack.c.h.b16 %v295
        %v393 = vunpack.c.l.b16 %v296
        %v394 = vunpack.c.h.b16 %v296
        %v395 = vunpack.c.l.b16 %v297
        %v396 = vunpack.c.l.b16 %v298
        %v397 = vunpack.c.h.b16 %v298
        %v398 = vunpack.c.l.b16 %v299
        %v399 = vunpack.c.h.b16 %v299
        %v400 = vunpack.c.l.b16 %v300
        %v401 = vunpack.c.h.b16 %v300
        %v402 = vunpack.c.l.b16 %v301
        %v403 = vunpack.c.l.b16 %v302
        %v404 = vunpack.c.h.b16 %v302
        %v405 = vunpack.c.l.b16 %v303
        %v406 = vunpack.c.h.b16 %v303
        %v407 = vunpack.c.l.b16 %v304
        %v408 = vunpack.c.h.b16 %v304
        %v409 = vunpack.c.l.b16 %v305
        %v410 = vunpack.c.l.b16 %v306
        %v411 = vunpack.c.h.b16 %v306
        %v412 = vunpack.c.l.b16 %v307
        %v413 = vunpack.c.h.b16 %v307
        %v414 = vunpack.c.l.b16 %v308
        %v415 = vunpack.c.h.b16 %v308
        %v416 = vunpack.c.l.b16 %v309
        %v417 = vunpack.c.l.b16 %v310
        %v418 = vunpack.c.h.b16 %v310
        %v419 = vunpack.c.l.b16 %v311
        %v420 = vunpack.c.h.b16 %v311
        %v421 = vunpack.c.l.b16 %v312
        %v422 = vunpack.c.h.b16 %v312
        %v423 = vunpack.c.l.b16 %v313
        %v424 = vunpack.c.l.b16 %v314
        %v425 = vunpack.c.h.b16 %v314
        %v426 = vunpack.c.l.b16 %v315
        %v427 = vunpack.c.h.b16 %v315
        %v428 = vunpack.c.l.b16 %v316
        %v429 = vunpack.c.h.b16 %v316
        %v430 = vunpack.c.l.b16 %v317
        %v431 = vunpack.c.l.b16 %v318
        %v432 = vunpack.c.h.b16 %v318
        %v433 = vunpack.c.l.b16 %v319
        %v434 = vunpack.c.h.b16 %v319
        %v435 = vunpack.c.l.b16 %v320
        %v436 = vunpack.c.h.b16 %v320
        %v437 = vunpack.c.l.b16 %v321
        %v438 = vpack.c.b16 %v375, %v368
        %v439 = vpack.c.b16 %v376, %v369
        %v440 = vpack.c.b16 %v377, %v370
        %v441 = vpack.c.b16 %v378, %v371
        %v442 = vpack.c.b16 %v379, %v372
        %v443 = vpack.c.b16 %v380, %v373
        %v444 = vpack.c.b16 %v381, %v374
        %v445 = vpack.c.b16 %v389, %v382
        %v446 = vpack.c.b16 %v390, %v383
        %v447 = vpack.c.b16 %v391, %v384
        %v448 = vpack.c.b16 %v392, %v385
        %v449 = vpack.c.b16 %v393, %v386
        %v450 = vpack.c.b16 %v394, %v387
        %v451 = vpack.c.b16 %v395, %v388
        %v452 = vpack.c.b16 %v403, %v396
        %v453 = vpack.c.b16 %v404, %v397
        %v454 = vpack.c.b16 %v405, %v398
        %v455 = vpack.c.b16 %v406, %v399
        %v456 = vpack.c.b16 %v407, %v400
        %v457 = vpack.c.b16 %v408, %v401
        %v458 = vpack.c.b16 %v409, %v402
        %v459 = vpack.c.b16 %v417, %v410
        %v460 = vpack.c.b16 %v418, %v411
        %v461 = vpack.c.b16 %v419, %v412
        %v462 = vpack.c.b16 %v420, %v413
        %v463 = vpack.c.b16 %v421, %v414
        %v464 = vpack.c.b16 %v422, %v415
        %v465 = vpack.c.b16 %v423, %v416
        %v466 = vpack.c.b16 %v431, %v424
        %v467 = vpack.c.b16 %v432, %v425
        %v468 = vpack.c.b16 %v433, %v426
        %v469 = vpack.c.b16 %v434, %v427
        %v470 = vpack.c.b16 %v435, %v428
        %v471 = vpack.c.b16 %v436, %v429
        %v472 = vpack.c.b16 %v437, %v430
        %vm501 = vcmask 613376
        %v503 = vsel %vm501, %v281, 0
        %vm505 = vcmask 1044480
        %vm506 = vcmask 1045504
        %v507 = vsel %vm505, 4294967295, 65535
        %v508 = vsel %vm506, %v507, 0
        %v510 = vand.u32 %v466, %v508
        %v513 = vand.u32 %v467, %v508
        %v516 = vand.u32 %v468, %v508
        %v519 = vand.u32 %v469, %v508
        %v522 = vand.u32 %v470, %v508
        %v525 = vand.u32 %v471, %v508
        %v528 = vand.u32 %v472, %v508
        %530 = vmatprep.subr.bf16.mxu0 %v439
        %531 = vmatpush1.bf16.msra.mxu0 %v438
        %532 = vmatprep.subr.bf16.mxu0 %v446
        %533 = vmatpush1.bf16.msra.mxu0 %v445
        %534 = vmatprep.subr.bf16.mxu0 %v453
        %535 = vmatpush1.bf16.msra.mxu0 %v452
        %536 = vmatprep.subr.bf16.mxu0 %v460
        %537 = vmatpush1.bf16.msra.mxu0 %v459
        %538 = vmatprep.subr.bf16.mxu0 %v513
        %539 = vmatpush1.bf16.msra.mxu0 %v510
        %540 = vmatprep.subr.bf16.mxu0 0
        %541 = vmatpush1.bf16.msra.mxu0 0
        %542 = vmatprep.subr.bf16.mxu0 0
        %543 = vmatpush1.bf16.msra.mxu0 0
        %544 = vmatprep.subr.bf16.mxu0 0
        %545 = vmatpush1.bf16.msra.mxu0 0
        %546 = vmatprep.subr.bf16.mxu0 0
        %547 = vmatpush1.bf16.msra.mxu0 0
        %548 = vmatprep.subr.bf16.mxu0 0
        %549 = vmatpush1.bf16.msra.mxu0 0
        %550 = vmatprep.subr.bf16.mxu0 0
        %551 = vmatpush1.bf16.msra.mxu0 0
        %552 = vmatprep.subr.bf16.mxu0 0
        %553 = vmatpush1.bf16.msra.mxu0 0
        %554 = vmatprep.subr.bf16.mxu0 0
        %555 = vmatpush1.bf16.msra.mxu0 0
        %556 = vmatprep.subr.bf16.mxu0 0
        %557 = vmatpush1.bf16.msra.mxu0 0
        %558 = vmatprep.subr.bf16.mxu0 0
        %559 = vmatpush1.bf16.msra.mxu0 0
        %560 = vmatprep.subr.bf16.mxu0 0
        %561 = vmatpush1.bf16.msra.mxu0 0
        %562 = vmatprep.mubr.bf16.mxu0 0
        %563 = vmatmul.mubr.bf16.gmra.mrb[0].mxu0 %v503
        %v564 = vpop.f32.mrb[0].mxu0
        %v565 = vadd.f32 %v326, %v564
        %v566 = vpop.f32.mrb[0].mxu0
        %v567 = vadd.f32 %v326, %v566
        %v568 = vpop.f32.mrb[0].mxu0
        %v569 = vpop.f32.mrb[0].mxu0
        %570 = vdwg.mxu0
        %571 = vmatprep.subr.bf16.mxu0 %v441
        %572 = vmatpush1.bf16.msra.mxu0 %v440
        %573 = vmatprep.subr.bf16.mxu0 %v448
        %574 = vmatpush1.bf16.msra.mxu0 %v447
        %575 = vmatprep.subr.bf16.mxu0 %v455
        %576 = vmatpush1.bf16.msra.mxu0 %v454
        %577 = vmatprep.subr.bf16.mxu0 %v462
        %578 = vmatpush1.bf16.msra.mxu0 %v461
        %579 = vmatprep.subr.bf16.mxu0 %v519
        %580 = vmatpush1.bf16.msra.mxu0 %v516
        %581 = vmatprep.subr.bf16.mxu0 0
        %582 = vmatpush1.bf16.msra.mxu0 0
        %583 = vmatprep.subr.bf16.mxu0 0
        %584 = vmatpush1.bf16.msra.mxu0 0
        %585 = vmatprep.subr.bf16.mxu0 0
        %586 = vmatpush1.bf16.msra.mxu0 0
        %587 = vmatprep.subr.bf16.mxu0 0
        %588 = vmatpush1.bf16.msra.mxu0 0
        %589 = vmatprep.subr.bf16.mxu0 0
        %590 = vmatpush1.bf16.msra.mxu0 0
        %591 = vmatprep.subr.bf16.mxu0 0
        %592 = vmatpush1.bf16.msra.mxu0 0
        %593 = vmatprep.subr.bf16.mxu0 0
        %594 = vmatpush1.bf16.msra.mxu0 0
        %595 = vmatprep.subr.bf16.mxu0 0
        %596 = vmatpush1.bf16.msra.mxu0 0
        %597 = vmatprep.subr.bf16.mxu0 0
        %598 = vmatpush1.bf16.msra.mxu0 0
        %599 = vmatprep.subr.bf16.mxu0 0
        %600 = vmatpush1.bf16.msra.mxu0 0
        %601 = vmatprep.subr.bf16.mxu0 0
        %602 = vmatpush1.bf16.msra.mxu0 0
        %603 = vmatprep.mubr.bf16.mxu0 0
        %604 = vmatmul.mubr.bf16.gmra.mrb[0].mxu0 %v503
        %v605 = vpop.f32.mrb[0].mxu0
        %v606 = vadd.f32 %v326, %v605
        %v607 = vpop.f32.mrb[0].mxu0
        %v608 = vadd.f32 %v326, %v607
        %v609 = vpop.f32.mrb[0].mxu0
        %v610 = vpop.f32.mrb[0].mxu0
        %611 = vdwg.mxu0
        %612 = vmatprep.subr.bf16.mxu0 %v443
        %613 = vmatpush1.bf16.msra.mxu0 %v442
        %614 = vmatprep.subr.bf16.mxu0 %v450
        %615 = vmatpush1.bf16.msra.mxu0 %v449
        %616 = vmatprep.subr.bf16.mxu0 %v457
        %617 = vmatpush1.bf16.msra.mxu0 %v456
        %618 = vmatprep.subr.bf16.mxu0 %v464
        %619 = vmatpush1.bf16.msra.mxu0 %v463
        %620 = vmatprep.subr.bf16.mxu0 %v525
        %621 = vmatpush1.bf16.msra.mxu0 %v522
        %622 = vmatprep.subr.bf16.mxu0 0
        %623 = vmatpush1.bf16.msra.mxu0 0
        %624 = vmatprep.subr.bf16.mxu0 0
        %625 = vmatpush1.bf16.msra.mxu0 0
        %626 = vmatprep.subr.bf16.mxu0 0
        %627 = vmatpush1.bf16.msra.mxu0 0
        %628 = vmatprep.subr.bf16.mxu0 0
        %629 = vmatpush1.bf16.msra.mxu0 0
        %630 = vmatprep.subr.bf16.mxu0 0
        %631 = vmatpush1.bf16.msra.mxu0 0
        %632 = vmatprep.subr.bf16.mxu0 0
        %633 = vmatpush1.bf16.msra.mxu0 0
        %634 = vmatprep.subr.bf16.mxu0 0
        %635 = vmatpush1.bf16.msra.mxu0 0
        %636 = vmatprep.subr.bf16.mxu0 0
        %637 = vmatpush1.bf16.msra.mxu0 0
        %638 = vmatprep.subr.bf16.mxu0 0
        %639 = vmatpush1.bf16.msra.mxu0 0
        %640 = vmatprep.subr.bf16.mxu0 0
        %641 = vmatpush1.bf16.msra.mxu0 0
        %642 = vmatprep.subr.bf16.mxu0 0
        %643 = vmatpush1.bf16.msra.mxu0 0
        %644 = vmatprep.mubr.bf16.mxu0 0
        %645 = vmatmul.mubr.bf16.gmra.mrb[0].mxu0 %v503
        %v646 = vpop.f32.mrb[0].mxu0
        %v647 = vadd.f32 %v326, %v646
        %v648 = vpop.f32.mrb[0].mxu0
        %v649 = vadd.f32 %v326, %v648
        %v650 = vpop.f32.mrb[0].mxu0
        %v651 = vpop.f32.mrb[0].mxu0
        %652 = vdwg.mxu0
        %653 = vmatprep.subr.bf16.mxu0 0
        %654 = vmatpush1.bf16.msra.mxu0 %v444
        %655 = vmatprep.subr.bf16.mxu0 0
        %656 = vmatpush1.bf16.msra.mxu0 %v451
        %657 = vmatprep.subr.bf16.mxu0 0
        %658 = vmatpush1.bf16.msra.mxu0 %v458
        %659 = vmatprep.subr.bf16.mxu0 0
        %660 = vmatpush1.bf16.msra.mxu0 %v465
        %661 = vmatprep.subr.bf16.mxu0 0
        %662 = vmatpush1.bf16.msra.mxu0 %v528
        %663 = vmatprep.subr.bf16.mxu0 0
        %664 = vmatpush1.bf16.msra.mxu0 0
        %665 = vmatprep.subr.bf16.mxu0 0
        %666 = vmatpush1.bf16.msra.mxu0 0
        %667 = vmatprep.subr.bf16.mxu0 0
        %668 = vmatpush1.bf16.msra.mxu0 0
        %669 = vmatprep.subr.bf16.mxu0 0
        %670 = vmatpush1.bf16.msra.mxu0 0
        %671 = vmatprep.subr.bf16.mxu0 0
        %672 = vmatpush1.bf16.msra.mxu0 0
        %673 = vmatprep.subr.bf16.mxu0 0
        %674 = vmatpush1.bf16.msra.mxu0 0
        %675 = vmatprep.subr.bf16.mxu0 0
        %676 = vmatpush1.bf16.msra.mxu0 0
        %677 = vmatprep.subr.bf16.mxu0 0
        %678 = vmatpush1.bf16.msra.mxu0 0
        %679 = vmatprep.subr.bf16.mxu0 0
        %680 = vmatpush1.bf16.msra.mxu0 0
        %681 = vmatprep.subr.bf16.mxu0 0
        %682 = vmatpush1.bf16.msra.mxu0 0
        %683 = vmatprep.subr.bf16.mxu0 0
        %684 = vmatpush1.bf16.msra.mxu0 0
        %685 = vmatprep.mubr.bf16.mxu0 0
        %686 = vmatmul.mubr.bf16.gmra.mrb[0].mxu0 %v503
        %v687 = vpop.f32.mrb[0].mxu0
        %v688 = vadd.f32 %v326, %v687
        %v689 = vpop.f32.mrb[0].mxu0
        %v690 = vpop.f32.mrb[0].mxu0
        %v691 = vpop.f32.mrb[0].mxu0
        %692 = vdwg.mxu0
        %v693 = vmax.f32 %v565, 0.0
        %v694 = vmax.f32 %v567, 0.0
        %v695 = vmax.f32 %v606, 0.0
        %v696 = vmax.f32 %v608, 0.0
        %v697 = vmax.f32 %v647, 0.0
        %v698 = vmax.f32 %v649, 0.0
        %v699 = vmax.f32 %v688, 0.0
        %v700 = vpack.c.bf16 %v693, %v693
        %v701 = vpack.c.bf16 %v694, %v694
        %v702 = vpack.c.bf16 %v695, %v695
        %v703 = vpack.c.bf16 %v696, %v696
        %v704 = vpack.c.bf16 %v697, %v697
        %v705 = vpack.c.bf16 %v698, %v698
        %v706 = vpack.c.bf16 %v699, %v699
        %v714 = vunpack.c.l.b16 %v700
        %v715 = vunpack.c.l.b16 %v701
        %v716 = vunpack.c.l.b16 %v702
        %v717 = vunpack.c.l.b16 %v703
        %v718 = vunpack.c.l.b16 %v704
        %v719 = vunpack.c.l.b16 %v705
        %v720 = vunpack.c.l.b16 %v706
        %v721 = vpack.c.b16 %v715, %v714
        %v722 = vpack.c.b16 %v717, %v716
        %v723 = vpack.c.b16 %v719, %v718
        %v724 = vpack.c.b16 %v720, %v720
        %729 = vst [vmem:[%s278] sm:$0xff] %v721
        %730 = vst [vmem:[%s278 + $0x8] sm:$0xff] %v722
        %731 = vst [vmem:[%s278 + $0x10] sm:$0xff] %v723
        %732 = vst [vmem:[%s278 + $0x18] sm:$0xf] %v724
        %s733 = smul.u32 7, %s14
        %p734 = scmp.lt.s32.totalorder %s733, 13
        %s735 = scalar_select %p734, %s733, 13
        %s736 = smul.addr %s735, 4
        %s737 = scalar_lea.vmem %s3, %s736
        // Predicated region
        $region59: #{lenet5a_forward.3} parent=53 // pred_check
          %p738 = pneg %p100
        $region60: #{lenet5a_forward.3} parent=53 // pred_check_branch
          %740 = sbr.rel (%p738) target = $region62
        $region61: #{lenet5a_forward.3} parent=53 // pred_region
          %s741 = smul.u32 7, %s14
        $region62: #{lenet5a_forward.3} parent=53 // pred_fallthru
          _
      $region54: #{lenet5a_forward.3} parent=5 // pred_fallthru
        _
      %p742 = scmp.le.s32.totalorder 2, %s9
      // Predicated region
      $region63: #{lenet5a_forward.3} parent=5 // pred_check
        %p743 = pneg %p742
      $region64: #{lenet5a_forward.3} parent=5 // pred_check_branch
        %745 = sbr.rel (%p743) target = $region66
      $region65: #{lenet5a_forward.3} parent=5 // pred_region
        %s746 = ssub.s32 %s9, 2
        // Predicated region
        $region67: #{lenet5a_forward.3} parent=65 // pred_check
          %p747 = pneg %p106
        $region68: #{lenet5a_forward.3} parent=65 // pred_check_branch
          %749 = sbr.rel (%p747) target = $region70
        $region69: #{lenet5a_forward.3} parent=65 // pred_region
          %s750 = smul.u32 7, %s15
          %p751 = scmp.lt.s32.totalorder %s750, 13
          %s752 = scalar_select %p751, %s750, 13
          %s753 = smul.addr %s752, 4
          %s754 = scalar_lea.vmem %s3, %s753
        $region70: #{lenet5a_forward.3} parent=65 // pred_fallthru
          _
      $region66: #{lenet5a_forward.3} parent=5 // pred_fallthru
        _
    $region6: #{lenet5a_forward.3} parent=1 // loop_footer
      %s13 = sadd.s32 1, %s9
    $region7: #{lenet5a_forward.3} parent=1 // loop_footer_branch
      %8 = sbr.rel target = $region3
    $region8: #{lenet5a_forward.3} parent=1 // loop_exit
      _

// kernel: lenet5a_forward.4
$region0: #{lenet5a_forward.4}
  #allocation0 [shape = 'u32[]', space=smem, size = 0x4, offset = 0x4, fixed_abs, tag = 'smem constant byte address 0x4 - core index']
  #allocation1 [shape = 'u32[144,128]{1,0:T(1,128)}', space=vmem, size = 0x12000, scoped, tag = 'internal scratch']
  %s0 = inlined_call_operand.vmem [shape: bf16[16,150], index: 0, kind: input, shape index: {}]
  %s1 = inlined_call_operand.vmem [shape: bf16[150,256], index: 1, kind: input, shape index: {}]
  %s2 = inlined_call_operand.vmem [shape: f32[16,1], index: 2, kind: input, shape index: {}]
  %s3 = inlined_call_operand.vmem [shape: bf16[16,256], index: 3, kind: output, shape index: {}]
  %s4 = sld [smem:[#allocation0]]
  $region123: #{lenet5a_forward.4} parent=0
    _
  %s6 = ssub.s32 1, %s4
  %s7 = scalar_select 0, %s6, %s4
  $region1: #{lenet5a_forward.4} parent=0
    #allocation2 [shape = 'u8[77824]{0}', space=vmem, size = 0x13000, scoped, tag = 'input window, operand 1']
    #allocation3 [shape = 'u8[8192]{0}', space=vmem, size = 0x2000, scoped, tag = 'output window, operand 0']
    loop: start=0, step=1, limit=4
    $region2: #{lenet5a_forward.4} parent=1 // loop_pre_header
      _
    $region3: #{lenet5a_forward.4} parent=1 // loop_header
      %s9 = sphi 0, %s13
      %p10 = scmp.ge.s32.totalorder %s9, 4
      %s17 = sphi 0, %s17
      %s19 = sphi 0, %s17
      %s20 = sphi 0, %s19
      %s34 = sphi 0, %s20
      %s40 = sphi 0, %s42
      %s43 = sphi 0, %s40
      %s44 = sphi 0, %s43
      %s60 = sphi 0, %s44
      %s64 = sphi 0, %s64
      %s66 = sphi 0, %s64
      %s67 = sphi 0, %s66
      %s81 = sphi 0, %s67
      %s87 = sphi 0, %s89
      %s90 = sphi 0, %s87
      %s91 = sphi 0, %s90
      %s107 = sphi 0, %s91
    $region4: #{lenet5a_forward.4} parent=1 // loop_header_branch
      %12 = sbr.rel (%p10) target = $region8
    $region5: #{lenet5a_forward.4} parent=1 // loop_body
      %s14 = ssub.s32 %s9, 1
      %s15 = ssub.s32 %s9, 2
      %s16 = sadd.s32 %s9, 1
      %s18 = sadd.s32 %s17, 1
      %p21 = scmp.eq.s32.totalorder %s9, 1
      %p22 = scmp.ne.s32.totalorder %s17, %s19
      %p23 = scmp.eq.s32.totalorder %s9, 0
      %p24 = por %p22, %p23
      %p25 = scmp.ne.s32.totalorder %s17, %s19
      %p26 = scmp.eq.s32.totalorder %s14, 1
      %p27 = por %p25, %p26
      %p28 = scmp.ne.s32.totalorder %s19, %s20
      %p29 = scmp.eq.s32.totalorder %s14, 0
      %p30 = por %p28, %p29
      %p31 = scmp.ne.s32.totalorder %s19, %s20
      %p32 = scmp.eq.s32.totalorder %s15, 1
      %p33 = por %p31, %p32
      %p35 = scmp.ne.s32.totalorder %s20, %s34
      %p36 = scmp.eq.s32.totalorder %s15, 0
      %p37 = por %p35, %p36
      %s38 = ssub.s32 %s9, %s16
      %p39 = scmp.eq.s32.totalorder %s38, 0
      %s41 = sadd.s32 %s40, 1
      %s42 = scalar_select %p39, %s40, %s41
      %p45 = pneg %p39
      %p46 = scmp.eq.s32.totalorder %s9, 1
      %p47 = por %p45, %p46
      %p48 = scmp.ne.s32.totalorder %s40, %s43
      %p49 = scmp.eq.s32.totalorder %s9, 0
      %p50 = por %p48, %p49
      %p51 = scmp.ne.s32.totalorder %s40, %s43
      %p52 = scmp.eq.s32.totalorder %s14, 1
      %p53 = por %p51, %p52
      %p54 = scmp.ne.s32.totalorder %s43, %s44
      %p55 = scmp.eq.s32.totalorder %s14, 0
      %p56 = por %p54, %p55
      %p57 = scmp.ne.s32.totalorder %s43, %s44
      %p58 = scmp.eq.s32.totalorder %s15, 1
      %p59 = por %p57, %p58
      %p61 = scmp.ne.s32.totalorder %s44, %s60
      %p62 = scmp.eq.s32.totalorder %s15, 0
      %p63 = por %p61, %p62
      %s65 = sadd.s32 %s64, 1
      %p68 = scmp.eq.s32.totalorder %s9, 1
      %p69 = scmp.ne.s32.totalorder %s64, %s66
      %p70 = scmp.eq.s32.totalorder %s9, 0
      %p71 = por %p69, %p70
      %p72 = scmp.ne.s32.totalorder %s64, %s66
      %p73 = scmp.eq.s32.totalorder %s14, 1
      %p74 = por %p72, %p73
      %p75 = scmp.ne.s32.totalorder %s66, %s67
      %p76 = scmp.eq.s32.totalorder %s14, 0
      %p77 = por %p75, %p76
      %p78 = scmp.ne.s32.totalorder %s66, %s67
      %p79 = scmp.eq.s32.totalorder %s15, 1
      %p80 = por %p78, %p79
      %p82 = scmp.ne.s32.totalorder %s67, %s81
      %p83 = scmp.eq.s32.totalorder %s15, 0
      %p84 = por %p82, %p83
      %s85 = ssub.s32 %s9, %s16
      %p86 = scmp.eq.s32.totalorder %s85, 0
      %s88 = sadd.s32 %s87, 1
      %s89 = scalar_select %p86, %s87, %s88
      %p92 = pneg %p86
      %p93 = scmp.eq.s32.totalorder %s9, 1
      %p94 = por %p92, %p93
      %p95 = scmp.ne.s32.totalorder %s87, %s90
      %p96 = scmp.eq.s32.totalorder %s9, 0
      %p97 = por %p95, %p96
      %p98 = scmp.ne.s32.totalorder %s87, %s90
      %p99 = scmp.eq.s32.totalorder %s14, 1
      %p100 = por %p98, %p99
      %p101 = scmp.ne.s32.totalorder %s90, %s91
      %p102 = scmp.eq.s32.totalorder %s14, 0
      %p103 = por %p101, %p102
      %p104 = scmp.ne.s32.totalorder %s90, %s91
      %p105 = scmp.eq.s32.totalorder %s15, 1
      %p106 = por %p104, %p105
      %p108 = scmp.ne.s32.totalorder %s91, %s107
      %p109 = scmp.eq.s32.totalorder %s15, 0
      %p110 = por %p108, %p109
      %p111 = scmp.le.s32.totalorder 1, %s9
      %p112 = scmp.lt.s32.totalorder %s9, 3
      %p113 = pnand %p111, %p112
      %p114 = pneg %p113
      // Predicated region
      $region9: #{lenet5a_forward.4} parent=5 // pred_check
        _
      $region10: #{lenet5a_forward.4} parent=5 // pred_check_branch
        %116 = sbr.rel (%p113) target = $region12
      $region11: #{lenet5a_forward.4} parent=5 // pred_region
        %s117 = ssub.s32 %s9, 1
        // Predicated region
        $region13: #{lenet5a_forward.4} parent=11 // pred_check
          %p118 = pneg %p30
        $region14: #{lenet5a_forward.4} parent=11 // pred_check_branch
          %120 = sbr.rel (%p118) target = $region16
        $region15: #{lenet5a_forward.4} parent=11 // pred_region
          _
        $region16: #{lenet5a_forward.4} parent=11 // pred_fallthru
          _
        // Predicated region
        $region17: #{lenet5a_forward.4} parent=11 // pred_check
          %p121 = pneg %p77
        $region18: #{lenet5a_forward.4} parent=11 // pred_check_branch
          %123 = sbr.rel (%p121) target = $region20
        $region19: #{lenet5a_forward.4} parent=11 // pred_region
          _
        $region20: #{lenet5a_forward.4} parent=11 // pred_fallthru
          _
      $region12: #{lenet5a_forward.4} parent=5 // pred_fallthru
        _
      %p124 = scmp.lt.s32.totalorder %s9, 2
      // Predicated region
      $region21: #{lenet5a_forward.4} parent=5 // pred_check
        %p125 = pneg %p124
      $region22: #{lenet5a_forward.4} parent=5 // pred_check_branch
        %127 = sbr.rel (%p125) target = $region24
      $region23: #{lenet5a_forward.4} parent=5 // pred_region
        // Predicated region
        $region25: #{lenet5a_forward.4} parent=23 // pred_check
          %p128 = pneg %p50
        $region26: #{lenet5a_forward.4} parent=23 // pred_check_branch
          %130 = sbr.rel (%p128) target = $region28
        $region27: #{lenet5a_forward.4} parent=23 // pred_region
          %s131 = sand.u32 %s40, 1
          %s132 = sand.u32 %s40, 1
          %s133 = smul.addr %s132, 76
          %s134 = scalar_lea.vmem [#allocation2], %s133
          %s135 = smul.addr %s9, 4
          %s136 = scalar_lea.vmem %s1, %s135
          // Predicated region
          $region29: #{lenet5a_forward.4} parent=27 // pred_check
            _
          $region30: #{lenet5a_forward.4} parent=27 // pred_check_branch
            %138 = sbr.rel (0) target = $region32
          $region31: #{lenet5a_forward.4} parent=27 // pred_region
            // Predicated region
            $region33: #{lenet5a_forward.4} parent=31 // pred_check
              _
            $region34: #{lenet5a_forward.4} parent=31 // pred_check_branch
              %140 = sbr.rel target = $region36
            $region35: #{lenet5a_forward.4} parent=31 // pred_region
              // Predicated region
              $region48: #{lenet5a_forward.4} parent=35 // pred_check
                _
              $region49: #{lenet5a_forward.4} parent=35 // pred_check_branch
                %191 = sbr.rel (0) target = $region51
              $region50: #{lenet5a_forward.4} parent=35 // pred_region
                loop: start=0, step=1, limit=1
                $region52: #{lenet5a_forward.4} parent=50 // loop_pre_header
                  _
                $region53: #{lenet5a_forward.4} parent=50 // loop_header
                  %s193 = sphi 0, %s197
                  %p194 = scmp.ge.s32.totalorder %s193, 1
                  %s198 = sphi %s136, %s136
                  %s199 = sphi %s134, %s134
                $region54: #{lenet5a_forward.4} parent=50 // loop_header_branch
                  %196 = sbr.rel (%p194) target = $region58
                $region55: #{lenet5a_forward.4} parent=50 // loop_body
                  _
                $region56: #{lenet5a_forward.4} parent=50 // loop_footer
                  %s197 = sadd.s32 1, %s193
                $region57: #{lenet5a_forward.4} parent=50 // loop_footer_branch
                  %192 = sbr.rel target = $region53
                $region58: #{lenet5a_forward.4} parent=50 // loop_exit
                  _
                loop: start=0, step=1, limit=1
                $region59: #{lenet5a_forward.4} parent=50 // loop_pre_header
                  _
                $region60: #{lenet5a_forward.4} parent=50 // loop_header
                  %s202 = sphi 0, %s206
                  %p203 = scmp.ge.s32.totalorder %s202, 1
                  %s207 = sphi %s136, %s136
                  %s208 = sphi %s134, %s134
                $region61: #{lenet5a_forward.4} parent=50 // loop_header_branch
                  %205 = sbr.rel (%p203) target = $region65
                $region62: #{lenet5a_forward.4} parent=50 // loop_body
                  %v209 = vld [vmem:[%s207] sm:$0xf]
                  %210 = vst [vmem:[%s208] sm:$0xf] %v209
                  %v211 = vld [vmem:[%s207 + $0x8] sm:$0xf]
                  %212 = vst [vmem:[%s208 + $0x4] sm:$0xf] %v211
                  %v213 = vld [vmem:[%s207 + $0x10] sm:$0xf]
                  %214 = vst [vmem:[%s208 + $0x8] sm:$0xf] %v213
                  %v215 = vld [vmem:[%s207 + $0x18] sm:$0xf]
                  %216 = vst [vmem:[%s208 + $0xc] sm:$0xf] %v215
                  %v217 = vld [vmem:[%s207 + $0x20] sm:$0xf]
                  %218 = vst [vmem:[%s208 + $0x10] sm:$0xf] %v217
                  %v219 = vld [vmem:[%s207 + $0x28] sm:$0xf]
                  %220 = vst [vmem:[%s208 + $0x14] sm:$0xf] %v219
                  %v221 = vld [vmem:[%s207 + $0x30] sm:$0xf]
                  %222 = vst [vmem:[%s208 + $0x18] sm:$0xf] %v221
                  %v223 = vld [vmem:[%s207 + $0x38] sm:$0xf]
                  %224 = vst [vmem:[%s208 + $0x1c] sm:$0xf] %v223
                  %v225 = vld [vmem:[%s207 + $0x40] sm:$0xf]
                  %226 = vst [vmem:[%s208 + $0x20] sm:$0xf] %v225
                  %v227 = vld [vmem:[%s207 + $0x48] sm:$0xf]
                  %228 = vst [vmem:[%s208 + $0x24] sm:$0xf] %v227
                  %v229 = vld [vmem:[%s207 + $0x50] sm:$0xf]
                  %230 = vst [vmem:[%s208 + $0x28] sm:$0xf] %v229
                  %v231 = vld [vmem:[%s207 + $0x58] sm:$0xf]
                  %232 = vst [vmem:[%s208 + $0x2c] sm:$0xf] %v231
                  %v233 = vld [vmem:[%s207 + $0x60] sm:$0xf]
                  %234 = vst [vmem:[%s208 + $0x30] sm:$0xf] %v233
                  %v235 = vld [vmem:[%s207 + $0x68] sm:$0xf]
                  %236 = vst [vmem:[%s208 + $0x34] sm:$0xf] %v235
                  %v237 = vld [vmem:[%s207 + $0x70] sm:$0xf]
                  %238 = vst [vmem:[%s208 + $0x38] sm:$0xf] %v237
                  %v239 = vld [vmem:[%s207 + $0x78] sm:$0xf]
                  %240 = vst [vmem:[%s208 + $0x3c] sm:$0xf] %v239
                  %v241 = vld [vmem:[%s207 + $0x80] sm:$0xf]
                  %242 = vst [vmem:[%s208 + $0x40] sm:$0xf] %v241
                  %v243 = vld [vmem:[%s207 + $0x88] sm:$0xf]
                  %244 = vst [vmem:[%s208 + $0x44] sm:$0xf] %v243
                  %v245 = vld [vmem:[%s207 + $0x90] sm:$0xf]
                  %246 = vst [vmem:[%s208 + $0x48] sm:$0xf] %v245
                $region63: #{lenet5a_forward.4} parent=50 // loop_footer
                  %s206 = sadd.s32 1, %s202
                $region64: #{lenet5a_forward.4} parent=50 // loop_footer_branch
                  %201 = sbr.rel target = $region60
                $region65: #{lenet5a_forward.4} parent=50 // loop_exit
                  _
              $region51: #{lenet5a_forward.4} parent=35 // pred_fallthru
                _
            $region36: #{lenet5a_forward.4} parent=31 // pred_fallthru
              _
            // Predicated region
            $region37: #{lenet5a_forward.4} parent=31 // pred_check
              _
            $region38: #{lenet5a_forward.4} parent=31 // pred_check_branch
              %142 = sbr.rel (0) target = $region40
            $region39: #{lenet5a_forward.4} parent=31 // pred_region
              loop: start=0, step=1, limit=1
              $region41: #{lenet5a_forward.4} parent=39 // loop_pre_header
                _
              $region42: #{lenet5a_forward.4} parent=39 // loop_header
                %s145 = sphi 0, %s149
                %p146 = scmp.ge.s32.totalorder %s145, 1
                %s150 = sphi %s136, %s136
                %s151 = sphi %s134, %s134
              $region43: #{lenet5a_forward.4} parent=39 // loop_header_branch
                %148 = sbr.rel (%p146) target = $region47
              $region44: #{lenet5a_forward.4} parent=39 // loop_body
                %v152 = vld [vmem:[%s150] sm:$0xf]
                %153 = vst [vmem:[%s151] sm:$0xf] %v152
                %v154 = vld [vmem:[%s150 + $0x8] sm:$0xf]
                %155 = vst [vmem:[%s151 + $0x4] sm:$0xf] %v154
                %v156 = vld [vmem:[%s150 + $0x10] sm:$0xf]
                %157 = vst [vmem:[%s151 + $0x8] sm:$0xf] %v156
                %v158 = vld [vmem:[%s150 + $0x18] sm:$0xf]
                %159 = vst [vmem:[%s151 + $0xc] sm:$0xf] %v158
                %v160 = vld [vmem:[%s150 + $0x20] sm:$0xf]
                %161 = vst [vmem:[%s151 + $0x10] sm:$0xf] %v160
                %v162 = vld [vmem:[%s150 + $0x28] sm:$0xf]
                %163 = vst [vmem:[%s151 + $0x14] sm:$0xf] %v162
                %v164 = vld [vmem:[%s150 + $0x30] sm:$0xf]
                %165 = vst [vmem:[%s151 + $0x18] sm:$0xf] %v164
                %v166 = vld [vmem:[%s150 + $0x38] sm:$0xf]
                %167 = vst [vmem:[%s151 + $0x1c] sm:$0xf] %v166
                %v168 = vld [vmem:[%s150 + $0x40] sm:$0xf]
                %169 = vst [vmem:[%s151 + $0x20] sm:$0xf] %v168
                %v170 = vld [vmem:[%s150 + $0x48] sm:$0xf]
                %171 = vst [vmem:[%s151 + $0x24] sm:$0xf] %v170
                %v172 = vld [vmem:[%s150 + $0x50] sm:$0xf]
                %173 = vst [vmem:[%s151 + $0x28] sm:$0xf] %v172
                %v174 = vld [vmem:[%s150 + $0x58] sm:$0xf]
                %175 = vst [vmem:[%s151 + $0x2c] sm:$0xf] %v174
                %v176 = vld [vmem:[%s150 + $0x60] sm:$0xf]
                %177 = vst [vmem:[%s151 + $0x30] sm:$0xf] %v176
                %v178 = vld [vmem:[%s150 + $0x68] sm:$0xf]
                %179 = vst [vmem:[%s151 + $0x34] sm:$0xf] %v178
                %v180 = vld [vmem:[%s150 + $0x70] sm:$0xf]
                %181 = vst [vmem:[%s151 + $0x38] sm:$0xf] %v180
                %v182 = vld [vmem:[%s150 + $0x78] sm:$0xf]
                %183 = vst [vmem:[%s151 + $0x3c] sm:$0xf] %v182
                %v184 = vld [vmem:[%s150 + $0x80] sm:$0xf]
                %185 = vst [vmem:[%s151 + $0x40] sm:$0xf] %v184
                %v186 = vld [vmem:[%s150 + $0x88] sm:$0xf]
                %187 = vst [vmem:[%s151 + $0x44] sm:$0xf] %v186
                %v188 = vld [vmem:[%s150 + $0x90] sm:$0xf]
                %189 = vst [vmem:[%s151 + $0x48] sm:$0xf] %v188
              $region45: #{lenet5a_forward.4} parent=39 // loop_footer
                %s149 = sadd.s32 1, %s145
              $region46: #{lenet5a_forward.4} parent=39 // loop_footer_branch
                %144 = sbr.rel target = $region42
              $region47: #{lenet5a_forward.4} parent=39 // loop_exit
                _
            $region40: #{lenet5a_forward.4} parent=31 // pred_fallthru
              _
          $region32: #{lenet5a_forward.4} parent=27 // pred_fallthru
            _
          %247 = vnop
        $region28: #{lenet5a_forward.4} parent=23 // pred_fallthru
          _
      $region24: #{lenet5a_forward.4} parent=5 // pred_fallthru
        _
      %p248 = scmp.le.s32.totalorder 1, %s9
      %p249 = scmp.lt.s32.totalorder %s9, 3
      %p250 = pnand %p248, %p249
      %p251 = pneg %p250
      // Predicated region
      $region66: #{lenet5a_forward.4} parent=5 // pred_check
        _
      $region67: #{lenet5a_forward.4} parent=5 // pred_check_branch
        %253 = sbr.rel (%p250) target = $region69
      $region68: #{lenet5a_forward.4} parent=5 // pred_region
        %s254 = ssub.s32 %s9, 1
        %s255 = sand.u32 %s43, 1
        %s256 = sand.u32 %s43, 1
        %s257 = smul.addr %s256, 76
        %s258 = scalar_lea.vmem [#allocation2], %s257
        // Predicated region
        $region70: #{lenet5a_forward.4} parent=68 // pred_check
          %p259 = pneg %p56
        $region71: #{lenet5a_forward.4} parent=68 // pred_check_branch
          %261 = sbr.rel (%p259) target = $region73
        $region72: #{lenet5a_forward.4} parent=68 // pred_region
          _
        $region73: #{lenet5a_forward.4} parent=68 // pred_fallthru
          _
        %p262 = pneg %p30
        %p263 = pneg %p27
        %s264 = sand.u32 %s43, 1
        %s265 = sand.u32 %s43, 1
        %s266 = smul.addr %s265, 76
        %s267 = scalar_lea.vmem [#allocation2], %s266
        %p268 = pneg %p56
        %p269 = pneg %p53
        %p270 = pneg %p77
        %p271 = pneg %p74
        %p272 = pneg %p103
        %p273 = pneg %p100
        %s274 = sand.u32 %s90, 1
        %s275 = sand.u32 %s90, 1
        %s276 = smul.addr %s275, 8
        %s277 = scalar_lea.vmem [#allocation3], %s276
        %v279 = vld [vmem:[%s0] sm:$0xff]
        %v280 = vld [vmem:[%s0 + $0x8] sm:$0xff]
        %v281 = vld [vmem:[%s258] sm:$0xf]
        %v282 = vld [vmem:[%s258 + $0x4] sm:$0xf]
        %v283 = vld [vmem:[%s258 + $0x8] sm:$0xf]
        %v284 = vld [vmem:[%s258 + $0xc] sm:$0xf]
        %v285 = vld [vmem:[%s258 + $0x10] sm:$0xf]
        %v286 = vld [vmem:[%s258 + $0x14] sm:$0xf]
        %v287 = vld [vmem:[%s258 + $0x18] sm:$0xf]
        %v288 = vld [vmem:[%s258 + $0x1c] sm:$0xf]
        %v289 = vld [vmem:[%s258 + $0x20] sm:$0xf]
        %v290 = vld [vmem:[%s258 + $0x24] sm:$0xf]
        %v291 = vld [vmem:[%s258 + $0x28] sm:$0xf]
        %v292 = vld [vmem:[%s258 + $0x2c] sm:$0xf]
        %v293 = vld [vmem:[%s258 + $0x30] sm:$0xf]
        %v294 = vld [vmem:[%s258 + $0x34] sm:$0xf]
        %v295 = vld [vmem:[%s258 + $0x38] sm:$0xf]
        %v296 = vld [vmem:[%s258 + $0x3c] sm:$0xf]
        %v297 = vld [vmem:[%s258 + $0x40] sm:$0xf]
        %v298 = vld [vmem:[%s258 + $0x44] sm:$0xf]
        %v299 = vld [vmem:[%s258 + $0x48] sm:$0x7]
        %v300 = vld [vmem:[%s2] sm:$0xff]
        %v301 = vld [vmem:[%s2 + $0x8] sm:$0xff]
        %303 = vset.pattern.permute.xlu0 0
        %304 = vperm.xlu0 %303, %v300
        %v305 = vpop.permute.xlu0 %304
        %308 = vset.pattern.permute.xlu0 0
        %309 = vperm.xlu0 %308, %v301
        %v310 = vpop.permute.xlu0 %309
        %v314 = vunpack.c.l.b16 %v279
        %v315 = vunpack.c.h.b16 %v279
        %v316 = vunpack.c.l.b16 %v280
        %v317 = vunpack.c.h.b16 %v280
        %v318 = vpack.c.b16 %v316, %v314
        %v319 = vpack.c.b16 %v317, %v315
        %v340 = vunpack.c.l.b16 %v281
        %v341 = vunpack.c.l.b16 %v282
        %v342 = vunpack.c.l.b16 %v283
        %v343 = vunpack.c.l.b16 %v284
        %v344 = vunpack.c.l.b16 %v285
        %v345 = vunpack.c.l.b16 %v286
        %v346 = vunpack.c.l.b16 %v287
        %v347 = vunpack.c.l.b16 %v288
        %v348 = vunpack.c.l.b16 %v289
        %v349 = vunpack.c.l.b16 %v290
        %v350 = vunpack.c.l.b16 %v291
        %v351 = vunpack.c.l.b16 %v292
        %v352 = vunpack.c.l.b16 %v293
        %v353 = vunpack.c.l.b16 %v294
        %v354 = vunpack.c.l.b16 %v295
        %v355 = vunpack.c.l.b16 %v296
        %v356 = vunpack.c.l.b16 %v297
        %v357 = vunpack.c.l.b16 %v298
        %v358 = vunpack.c.l.b16 %v299
        %v359 = vpack.c.b16 %v341, %v340
        %v360 = vpack.c.b16 %v343, %v342
        %v361 = vpack.c.b16 %v345, %v344
        %v362 = vpack.c.b16 %v347, %v346
        %v363 = vpack.c.b16 %v349, %v348
        %v364 = vpack.c.b16 %v351, %v350
        %v365 = vpack.c.b16 %v353, %v352
        %v366 = vpack.c.b16 %v355, %v354
        %v367 = vpack.c.b16 %v357, %v356
        %v368 = vpack.c.b16 %v358, %v358
        %vm378 = vcmask 179200
        %v380 = vsel %vm378, %v319, 0
        %vm382 = vcmask 1042432
        %v384 = vsel %vm382, %v368, 0
        %386 = vmatprep.subr.bf16.mxu0 0
        %387 = vmatpush1.bf16.msra.mxu0 %v359
        %388 = vmatprep.subr.bf16.mxu0 0
        %389 = vmatpush1.bf16.msra.mxu0 %v360
        %390 = vmatprep.subr.bf16.mxu0 0
        %391 = vmatpush1.bf16.msra.mxu0 %v361
        %392 = vmatprep.subr.bf16.mxu0 0
        %393 = vmatpush1.bf16.msra.mxu0 %v362
        %394 = vmatprep.subr.bf16.mxu0 0
        %395 = vmatpush1.bf16.msra.mxu0 %v363
        %396 = vmatprep.subr.bf16.mxu0 0
        %397 = vmatpush1.bf16.msra.mxu0 %v364
        %398 = vmatprep.subr.bf16.mxu0 0
        %399 = vmatpush1.bf16.msra.mxu0 %v365
        %400 = vmatprep.subr.bf16.mxu0 0
        %401 = vmatpush1.bf16.msra.mxu0 %v366
        %402 = vmatprep.subr.bf16.mxu0 0
        %403 = vmatpush1.bf16.msra.mxu0 %v367
        %404 = vmatprep.subr.bf16.mxu0 0
        %405 = vmatpush1.bf16.msra.mxu0 %v384
        %406 = vmatprep.subr.bf16.mxu0 0
        %407 = vmatpush1.bf16.msra.mxu0 0
        %408 = vmatprep.subr.bf16.mxu0 0
        %409 = vmatpush1.bf16.msra.mxu0 0
        %410 = vmatprep.subr.bf16.mxu0 0
        %411 = vmatpush1.bf16.msra.mxu0 0
        %412 = vmatprep.subr.bf16.mxu0 0
        %413 = vmatpush1.bf16.msra.mxu0 0
        %414 = vmatprep.subr.bf16.mxu0 0
        %415 = vmatpush1.bf16.msra.mxu0 0
        %416 = vmatprep.subr.bf16.mxu0 0
        %417 = vmatpush1.bf16.msra.mxu0 0
        %418 = vmatprep.mubr.bf16.mxu0 %v380
        %419 = vmatmul.mubr.bf16.gmra.mrb[0].mxu0 %v318
        %v420 = vpop.f32.mrb[0].mxu0
        %v421 = vadd.f32 %v305, %v420
        %v422 = vpop.f32.mrb[0].mxu0
        %v423 = vpop.f32.mrb[0].mxu0
        %v424 = vadd.f32 %v310, %v423
        %v425 = vpop.f32.mrb[0].mxu0
        %426 = vdwg.mxu0
        %v427 = vmax.f32 %v421, 0.0
        %v428 = vmax.f32 %v424, 0.0
        %v429 = vpack.c.bf16 %v428, %v427
        %v431 = vunpack.c.l.b16 %v429
        %v432 = vunpack.c.h.b16 %v429
        %v433 = vpack.c.b16 %v431, %v431
        %v434 = vpack.c.b16 %v432, %v432
        %437 = vst [vmem:[%s277] sm:$0xf] %v433
        %438 = vst [vmem:[%s277 + $0x4] sm:$0xf] %v434
        %s439 = sand.u32 %s90, 1
        %s440 = sand.u32 %s90, 1
        %s441 = smul.addr %s440, 8
        %s442 = scalar_lea.vmem [#allocation3], %s441
        // Predicated region
        $region74: #{lenet5a_forward.4} parent=68 // pred_check
          %p443 = pneg %p100
        $region75: #{lenet5a_forward.4} parent=68 // pred_check_branch
          %445 = sbr.rel (%p443) target = $region77
        $region76: #{lenet5a_forward.4} parent=68 // pred_region
          %s446 = smul.addr %s14, 4
          %s447 = scalar_lea.vmem %s3, %s446
          // Predicated region
          $region78: #{lenet5a_forward.4} parent=76 // pred_check
            _
          $region79: #{lenet5a_forward.4} parent=76 // pred_check_branch
            %449 = sbr.rel (0) target = $region81
          $region80: #{lenet5a_forward.4} parent=76 // pred_region
            // Predicated region
            $region82: #{lenet5a_forward.4} parent=80 // pred_check
              _
            $region83: #{lenet5a_forward.4} parent=80 // pred_check_branch
              %451 = sbr.rel target = $region85
            $region84: #{lenet5a_forward.4} parent=80 // pred_region
              // Predicated region
              $region97: #{lenet5a_forward.4} parent=84 // pred_check
                _
              $region98: #{lenet5a_forward.4} parent=84 // pred_check_branch
                %468 = sbr.rel (0) target = $region100
              $region99: #{lenet5a_forward.4} parent=84 // pred_region
                loop: start=0, step=1, limit=1
                $region101: #{lenet5a_forward.4} parent=99 // loop_pre_header
                  _
                $region102: #{lenet5a_forward.4} parent=99 // loop_header
                  %s470 = sphi 0, %s474
                  %p471 = scmp.ge.s32.totalorder %s470, 1
                  %s475 = sphi %s442, %s442
                  %s476 = sphi %s447, %s447
                $region103: #{lenet5a_forward.4} parent=99 // loop_header_branch
                  %473 = sbr.rel (%p471) target = $region107
                $region104: #{lenet5a_forward.4} parent=99 // loop_body
                  _
                $region105: #{lenet5a_forward.4} parent=99 // loop_footer
                  %s474 = sadd.s32 1, %s470
                $region106: #{lenet5a_forward.4} parent=99 // loop_footer_branch
                  %469 = sbr.rel target = $region102
                $region107: #{lenet5a_forward.4} parent=99 // loop_exit
                  _
                loop: start=0, step=1, limit=1
                $region108: #{lenet5a_forward.4} parent=99 // loop_pre_header
                  _
                $region109: #{lenet5a_forward.4} parent=99 // loop_header
                  %s479 = sphi 0, %s483
                  %p480 = scmp.ge.s32.totalorder %s479, 1
                  %s484 = sphi %s442, %s442
                  %s485 = sphi %s447, %s447
                $region110: #{lenet5a_forward.4} parent=99 // loop_header_branch
                  %482 = sbr.rel (%p480) target = $region114
                $region111: #{lenet5a_forward.4} parent=99 // loop_body
                  %v486 = vld [vmem:[%s484] sm:$0xf]
                  %487 = vst [vmem:[%s485] sm:$0xf] %v486
                  %v488 = vld [vmem:[%s484 + $0x4] sm:$0xf]
                  %489 = vst [vmem:[%s485 + $0x8] sm:$0xf] %v488
                $region112: #{lenet5a_forward.4} parent=99 // loop_footer
                  %s483 = sadd.s32 1, %s479
                $region113: #{lenet5a_forward.4} parent=99 // loop_footer_branch
                  %478 = sbr.rel target = $region109
                $region114: #{lenet5a_forward.4} parent=99 // loop_exit
                  _
              $region100: #{lenet5a_forward.4} parent=84 // pred_fallthru
                _
            $region85: #{lenet5a_forward.4} parent=80 // pred_fallthru
              _
            // Predicated region
            $region86: #{lenet5a_forward.4} parent=80 // pred_check
              _
            $region87: #{lenet5a_forward.4} parent=80 // pred_check_branch
              %453 = sbr.rel (0) target = $region89
            $region88: #{lenet5a_forward.4} parent=80 // pred_region
              loop: start=0, step=1, limit=1
              $region90: #{lenet5a_forward.4} parent=88 // loop_pre_header
                _
              $region91: #{lenet5a_forward.4} parent=88 // loop_header
                %s456 = sphi 0, %s460
                %p457 = scmp.ge.s32.totalorder %s456, 1
                %s461 = sphi %s442, %s442
                %s462 = sphi %s447, %s447
              $region92: #{lenet5a_forward.4} parent=88 // loop_header_branch
                %459 = sbr.rel (%p457) target = $region96
              $region93: #{lenet5a_forward.4} parent=88 // loop_body
                %v463 = vld [vmem:[%s461] sm:$0xf]
                %464 = vst [vmem:[%s462] sm:$0xf] %v463
                %v465 = vld [vmem:[%s461 + $0x4] sm:$0xf]
                %466 = vst [vmem:[%s462 + $0x8] sm:$0xf] %v465
              $region94: #{lenet5a_forward.4} parent=88 // loop_footer
                %s460 = sadd.s32 1, %s456
              $region95: #{lenet5a_forward.4} parent=88 // loop_footer_branch
                %455 = sbr.rel target = $region91
              $region96: #{lenet5a_forward.4} parent=88 // loop_exit
                _
            $region89: #{lenet5a_forward.4} parent=80 // pred_fallthru
              _
          $region81: #{lenet5a_forward.4} parent=76 // pred_fallthru
            _
          %490 = vnop
        $region77: #{lenet5a_forward.4} parent=68 // pred_fallthru
          _
      $region69: #{lenet5a_forward.4} parent=5 // pred_fallthru
        _
      %p491 = scmp.le.s32.totalorder 2, %s9
      // Predicated region
      $region115: #{lenet5a_forward.4} parent=5 // pred_check
        %p492 = pneg %p491
      $region116: #{lenet5a_forward.4} parent=5 // pred_check_branch
        %494 = sbr.rel (%p492) target = $region118
      $region117: #{lenet5a_forward.4} parent=5 // pred_region
        %s495 = ssub.s32 %s9, 2
        // Predicated region
        $region119: #{lenet5a_forward.4} parent=117 // pred_check
          %p496 = pneg %p106
        $region120: #{lenet5a_forward.4} parent=117 // pred_check_branch
          %498 = sbr.rel (%p496) target = $region122
        $region121: #{lenet5a_forward.4} parent=117 // pred_region
          %s499 = sand.u32 %s91, 1
          %s500 = sand.u32 %s91, 1
          %s501 = smul.addr %s500, 8
          %s502 = scalar_lea.vmem [#allocation3], %s501
        $region122: #{lenet5a_forward.4} parent=117 // pred_fallthru
          _
      $region118: #{lenet5a_forward.4} parent=5 // pred_fallthru
        _
    $region6: #{lenet5a_forward.4} parent=1 // loop_footer
      %s13 = sadd.s32 1, %s9
    $region7: #{lenet5a_forward.4} parent=1 // loop_footer_branch
      %8 = sbr.rel target = $region3
    $region8: #{lenet5a_forward.4} parent=1 // loop_exit
      _

// kernel: lenet5a_forward.5
$region0: #{lenet5a_forward.5}
  #allocation0 [shape = 'u32[]', space=smem, size = 0x4, offset = 0x4, fixed_abs, tag = 'smem constant byte address 0x4 - core index']
  #allocation1 [shape = 'u32[144,128]{1,0:T(1,128)}', space=vmem, size = 0x12000, scoped, tag = 'internal scratch']
  %s0 = inlined_call_operand.vmem [shape: bf16[16,400], index: 0, kind: input, shape index: {}]
  %s1 = inlined_call_operand.vmem [shape: bf16[400,128], index: 1, kind: input, shape index: {}]
  %s2 = inlined_call_operand.vmem [shape: f32[1,128], index: 2, kind: input, shape index: {}]
  %s3 = inlined_call_operand.vmem [shape: bf16[128,128], index: 3, kind: input, shape index: {}]
  %s4 = inlined_call_operand.vmem [shape: f32[1,128], index: 4, kind: input, shape index: {}]
  %s5 = inlined_call_operand.vmem [shape: bf16[128,128], index: 5, kind: input, shape index: {}]
  %s6 = inlined_call_operand.vmem [shape: f32[1,128], index: 6, kind: input, shape index: {}]
  %s7 = inlined_call_operand.vmem [shape: f32[16,128], index: 7, kind: output, shape index: {}]
  %s8 = sld [smem:[#allocation0]]
  $region38: #{lenet5a_forward.5} parent=0
    _
  %s10 = ssub.s32 1, %s8
  %s11 = scalar_select 0, %s10, %s8
  // Predicated region
  $region2: #{lenet5a_forward.5} parent=0 // pred_check
    _
  $region3: #{lenet5a_forward.5} parent=0 // pred_check_branch
    %13 = sbr.rel (0) target = $region5
  $region4: #{lenet5a_forward.5} parent=0 // pred_region
    _
  $region5: #{lenet5a_forward.5} parent=0 // pred_fallthru
    _
  // Predicated region
  $region6: #{lenet5a_forward.5} parent=0 // pred_check
    _
  $region7: #{lenet5a_forward.5} parent=0 // pred_check_branch
    %15 = sbr.rel (0) target = $region9
  $region8: #{lenet5a_forward.5} parent=0 // pred_region
    _
  $region9: #{lenet5a_forward.5} parent=0 // pred_fallthru
    _
  // Predicated region
  $region10: #{lenet5a_forward.5} parent=0 // pred_check
    _
  $region11: #{lenet5a_forward.5} parent=0 // pred_check_branch
    %17 = sbr.rel (0) target = $region13
  $region12: #{lenet5a_forward.5} parent=0 // pred_region
    _
  $region13: #{lenet5a_forward.5} parent=0 // pred_fallthru
    _
  // Predicated region
  $region14: #{lenet5a_forward.5} parent=0 // pred_check
    _
  $region15: #{lenet5a_forward.5} parent=0 // pred_check_branch
    %19 = sbr.rel (0) target = $region17
  $region16: #{lenet5a_forward.5} parent=0 // pred_region
    _
  $region17: #{lenet5a_forward.5} parent=0 // pred_fallthru
    _
  // Predicated region
  $region18: #{lenet5a_forward.5} parent=0 // pred_check
    _
  $region19: #{lenet5a_forward.5} parent=0 // pred_check_branch
    %21 = sbr.rel (0) target = $region21
  $region20: #{lenet5a_forward.5} parent=0 // pred_region
    _
  $region21: #{lenet5a_forward.5} parent=0 // pred_fallthru
    _
  // Predicated region
  $region22: #{lenet5a_forward.5} parent=0 // pred_check
    _
  $region23: #{lenet5a_forward.5} parent=0 // pred_check_branch
    %23 = sbr.rel (0) target = $region25
  $region24: #{lenet5a_forward.5} parent=0 // pred_region
    _
  $region25: #{lenet5a_forward.5} parent=0 // pred_fallthru
    _
  // Predicated region
  $region26: #{lenet5a_forward.5} parent=0 // pred_check
    _
  $region27: #{lenet5a_forward.5} parent=0 // pred_check_branch
    %25 = sbr.rel (0) target = $region29
  $region28: #{lenet5a_forward.5} parent=0 // pred_region
    _
  $region29: #{lenet5a_forward.5} parent=0 // pred_fallthru
    _
  %v27 = vld [vmem:[%s0] sm:$0xff]
  %v28 = vld [vmem:[%s0 + $0x8] sm:$0xff]
  %v29 = vld [vmem:[%s0 + $0x10] sm:$0xff]
  %v30 = vld [vmem:[%s0 + $0x18] sm:$0xff]
  %v31 = vld [vmem:[%s1] sm:$0xf]
  %v32 = vld [vmem:[%s1 + $0x4] sm:$0xf]
  %v33 = vld [vmem:[%s1 + $0x8] sm:$0xf]
  %v34 = vld [vmem:[%s1 + $0xc] sm:$0xf]
  %v35 = vld [vmem:[%s1 + $0x10] sm:$0xf]
  %v36 = vld [vmem:[%s1 + $0x14] sm:$0xf]
  %v37 = vld [vmem:[%s1 + $0x18] sm:$0xf]
  %v38 = vld [vmem:[%s1 + $0x1c] sm:$0xf]
  %v39 = vld [vmem:[%s1 + $0x20] sm:$0xf]
  %v40 = vld [vmem:[%s1 + $0x24] sm:$0xf]
  %v41 = vld [vmem:[%s1 + $0x28] sm:$0xf]
  %v42 = vld [vmem:[%s1 + $0x2c] sm:$0xf]
  %v43 = vld [vmem:[%s1 + $0x30] sm:$0xf]
  %v44 = vld [vmem:[%s1 + $0x34] sm:$0xf]
  %v45 = vld [vmem:[%s1 + $0x38] sm:$0xf]
  %v46 = vld [vmem:[%s1 + $0x3c] sm:$0xf]
  %v47 = vld [vmem:[%s1 + $0x40] sm:$0xf]
  %v48 = vld [vmem:[%s1 + $0x44] sm:$0xf]
  %v49 = vld [vmem:[%s1 + $0x48] sm:$0xf]
  %v50 = vld [vmem:[%s1 + $0x4c] sm:$0xf]
  %v51 = vld [vmem:[%s1 + $0x50] sm:$0xf]
  %v52 = vld [vmem:[%s1 + $0x54] sm:$0xf]
  %v53 = vld [vmem:[%s1 + $0x58] sm:$0xf]
  %v54 = vld [vmem:[%s1 + $0x5c] sm:$0xf]
  %v55 = vld [vmem:[%s1 + $0x60] sm:$0xf]
  %v56 = vld [vmem:[%s1 + $0x64] sm:$0xf]
  %v57 = vld [vmem:[%s1 + $0x68] sm:$0xf]
  %v58 = vld [vmem:[%s1 + $0x6c] sm:$0xf]
  %v59 = vld [vmem:[%s1 + $0x70] sm:$0xf]
  %v60 = vld [vmem:[%s1 + $0x74] sm:$0xf]
  %v61 = vld [vmem:[%s1 + $0x78] sm:$0xf]
  %v62 = vld [vmem:[%s1 + $0x7c] sm:$0xf]
  %v63 = vld [vmem:[%s1 + $0x80] sm:$0xf]
  %v64 = vld [vmem:[%s1 + $0x84] sm:$0xf]
  %v65 = vld [vmem:[%s1 + $0x88] sm:$0xf]
  %v66 = vld [vmem:[%s1 + $0x8c] sm:$0xf]
  %v67 = vld [vmem:[%s1 + $0x90] sm:$0xf]
  %v68 = vld [vmem:[%s1 + $0x94] sm:$0xf]
  %v69 = vld [vmem:[%s1 + $0x98] sm:$0xf]
  %v70 = vld [vmem:[%s1 + $0x9c] sm:$0xf]
  %v71 = vld [vmem:[%s1 + $0xa0] sm:$0xf]
  %v72 = vld [vmem:[%s1 + $0xa4] sm:$0xf]
  %v73 = vld [vmem:[%s1 + $0xa8] sm:$0xf]
  %v74 = vld [vmem:[%s1 + $0xac] sm:$0xf]
  %v75 = vld [vmem:[%s1 + $0xb0] sm:$0xf]
  %v76 = vld [vmem:[%s1 + $0xb4] sm:$0xf]
  %v77 = vld [vmem:[%s1 + $0xb8] sm:$0xf]
  %v78 = vld [vmem:[%s1 + $0xbc] sm:$0xf]
  %v79 = vld [vmem:[%s1 + $0xc0] sm:$0xf]
  %v80 = vld [vmem:[%s1 + $0xc4] sm:$0xf]
  %v81 = vld [vmem:[%s2] sm:$0x1]
  %v83 = vlaneseq
  %v84 = vshrl.u32 %v83, 7
  %v85 = vsub.s32 0, %v84
  %v86 = vrot.slane %v81, %v85
  %v92 = vunpack.c.l.b16 %v27
  %v93 = vunpack.c.h.b16 %v27
  %v94 = vunpack.c.l.b16 %v28
  %v95 = vunpack.c.h.b16 %v28
  %v96 = vunpack.c.l.b16 %v29
  %v97 = vunpack.c.h.b16 %v29
  %v98 = vunpack.c.l.b16 %v30
  %v99 = vunpack.c.h.b16 %v30
  %v100 = vpack.c.b16 %v96, %v92
  %v101 = vpack.c.b16 %v97, %v93
  %v102 = vpack.c.b16 %v98, %v94
  %v103 = vpack.c.b16 %v99, %v95
  %v157 = vunpack.c.l.b16 %v31
  %v158 = vunpack.c.l.b16 %v32
  %v159 = vunpack.c.l.b16 %v33
  %v160 = vunpack.c.l.b16 %v34
  %v161 = vunpack.c.l.b16 %v35
  %v162 = vunpack.c.l.b16 %v36
  %v163 = vunpack.c.l.b16 %v37
  %v164 = vunpack.c.l.b16 %v38
  %v165 = vunpack.c.l.b16 %v39
  %v166 = vunpack.c.l.b16 %v40
  %v167 = vunpack.c.l.b16 %v41
  %v168 = vunpack.c.l.b16 %v42
  %v169 = vunpack.c.l.b16 %v43
  %v170 = vunpack.c.l.b16 %v44
  %v171 = vunpack.c.l.b16 %v45
  %v172 = vunpack.c.l.b16 %v46
  %v173 = vunpack.c.l.b16 %v47
  %v174 = vunpack.c.l.b16 %v48
  %v175 = vunpack.c.l.b16 %v49
  %v176 = vunpack.c.l.b16 %v50
  %v177 = vunpack.c.l.b16 %v51
  %v178 = vunpack.c.l.b16 %v52
  %v179 = vunpack.c.l.b16 %v53
  %v180 = vunpack.c.l.b16 %v54
  %v181 = vunpack.c.l.b16 %v55
  %v182 = vunpack.c.l.b16 %v56
  %v183 = vunpack.c.l.b16 %v57
  %v184 = vunpack.c.l.b16 %v58
  %v185 = vunpack.c.l.b16 %v59
  %v186 = vunpack.c.l.b16 %v60
  %v187 = vunpack.c.l.b16 %v61
  %v188 = vunpack.c.l.b16 %v62
  %v189 = vunpack.c.l.b16 %v63
  %v190 = vunpack.c.l.b16 %v64
  %v191 = vunpack.c.l.b16 %v65
  %v192 = vunpack.c.l.b16 %v66
  %v193 = vunpack.c.l.b16 %v67
  %v194 = vunpack.c.l.b16 %v68
  %v195 = vunpack.c.l.b16 %v69
  %v196 = vunpack.c.l.b16 %v70
  %v197 = vunpack.c.l.b16 %v71
  %v198 = vunpack.c.l.b16 %v72
  %v199 = vunpack.c.l.b16 %v73
  %v200 = vunpack.c.l.b16 %v74
  %v201 = vunpack.c.l.b16 %v75
  %v202 = vunpack.c.l.b16 %v76
  %v203 = vunpack.c.l.b16 %v77
  %v204 = vunpack.c.l.b16 %v78
  %v205 = vunpack.c.l.b16 %v79
  %v206 = vunpack.c.l.b16 %v80
  %v207 = vpack.c.b16 %v158, %v157
  %v208 = vpack.c.b16 %v160, %v159
  %v209 = vpack.c.b16 %v162, %v161
  %v210 = vpack.c.b16 %v164, %v163
  %v211 = vpack.c.b16 %v166, %v165
  %v212 = vpack.c.b16 %v168, %v167
  %v213 = vpack.c.b16 %v170, %v169
  %v214 = vpack.c.b16 %v172, %v171
  %v215 = vpack.c.b16 %v174, %v173
  %v216 = vpack.c.b16 %v176, %v175
  %v217 = vpack.c.b16 %v178, %v177
  %v218 = vpack.c.b16 %v180, %v179
  %v219 = vpack.c.b16 %v182, %v181
  %v220 = vpack.c.b16 %v184, %v183
  %v221 = vpack.c.b16 %v186, %v185
  %v222 = vpack.c.b16 %v188, %v187
  %v223 = vpack.c.b16 %v190, %v189
  %v224 = vpack.c.b16 %v192, %v191
  %v225 = vpack.c.b16 %v194, %v193
  %v226 = vpack.c.b16 %v196, %v195
  %v227 = vpack.c.b16 %v198, %v197
  %v228 = vpack.c.b16 %v200, %v199
  %v229 = vpack.c.b16 %v202, %v201
  %v230 = vpack.c.b16 %v204, %v203
  %v231 = vpack.c.b16 %v206, %v205
  %vm257 = vcmask 130048
  %v259 = vsel %vm257, %v103, 0
  %261 = vmatprep.subr.bf16.mxu0 0
  %262 = vmatpush1.bf16.msra.mxu0 %v207
  %263 = vmatprep.subr.bf16.mxu0 0
  %264 = vmatpush1.bf16.msra.mxu0 %v208
  %265 = vmatprep.subr.bf16.mxu0 0
  %266 = vmatpush1.bf16.msra.mxu0 %v209
  %267 = vmatprep.subr.bf16.mxu0 0
  %268 = vmatpush1.bf16.msra.mxu0 %v210
  %269 = vmatprep.subr.bf16.mxu0 0
  %270 = vmatpush1.bf16.msra.mxu0 %v211
  %271 = vmatprep.subr.bf16.mxu0 0
  %272 = vmatpush1.bf16.msra.mxu0 %v212
  %273 = vmatprep.subr.bf16.mxu0 0
  %274 = vmatpush1.bf16.msra.mxu0 %v213
  %275 = vmatprep.subr.bf16.mxu0 0
  %276 = vmatpush1.bf16.msra.mxu0 %v214
  %277 = vmatprep.subr.bf16.mxu0 0
  %278 = vmatpush1.bf16.msra.mxu0 %v215
  %279 = vmatprep.subr.bf16.mxu0 0
  %280 = vmatpush1.bf16.msra.mxu0 %v216
  %281 = vmatprep.subr.bf16.mxu0 0
  %282 = vmatpush1.bf16.msra.mxu0 %v217
  %283 = vmatprep.subr.bf16.mxu0 0
  %284 = vmatpush1.bf16.msra.mxu0 %v218
  %285 = vmatprep.subr.bf16.mxu0 0
  %286 = vmatpush1.bf16.msra.mxu0 %v219
  %287 = vmatprep.subr.bf16.mxu0 0
  %288 = vmatpush1.bf16.msra.mxu0 %v220
  %289 = vmatprep.subr.bf16.mxu0 0
  %290 = vmatpush1.bf16.msra.mxu0 %v221
  %291 = vmatprep.subr.bf16.mxu0 0
  %292 = vmatpush1.bf16.msra.mxu0 %v222
  %293 = vmatprep.mubr.bf16.mxu0 %v101
  %294 = vmatmul.mubr.bf16.gmra.mrb[0].mxu0 %v100
  %v295 = vpop.f32.mrb[0].mxu0
  %v296 = vadd.f32 %v86, %v295
  %v297 = vpop.f32.mrb[0].mxu0
  %v298 = vpop.f32.mrb[0].mxu0
  %v299 = vadd.f32 %v86, %v298
  %v300 = vpop.f32.mrb[0].mxu0
  %301 = vdwg.mxu0
  %302 = vmatprep.subr.bf16.mxu0 0
  %303 = vmatpush1.bf16.msra.mxu0 %v223
  %304 = vmatprep.subr.bf16.mxu0 0
  %305 = vmatpush1.bf16.msra.mxu0 %v224
  %306 = vmatprep.subr.bf16.mxu0 0
  %307 = vmatpush1.bf16.msra.mxu0 %v225
  %308 = vmatprep.subr.bf16.mxu0 0
  %309 = vmatpush1.bf16.msra.mxu0 %v226
  %310 = vmatprep.subr.bf16.mxu0 0
  %311 = vmatpush1.bf16.msra.mxu0 %v227
  %312 = vmatprep.subr.bf16.mxu0 0
  %313 = vmatpush1.bf16.msra.mxu0 %v228
  %314 = vmatprep.subr.bf16.mxu0 0
  %315 = vmatpush1.bf16.msra.mxu0 %v229
  %316 = vmatprep.subr.bf16.mxu0 0
  %317 = vmatpush1.bf16.msra.mxu0 %v230
  %318 = vmatprep.subr.bf16.mxu0 0
  %319 = vmatpush1.bf16.msra.mxu0 %v231
  %320 = vmatprep.subr.bf16.mxu0 0
  %321 = vmatpush1.bf16.msra.mxu0 0
  %322 = vmatprep.subr.bf16.mxu0 0
  %323 = vmatpush1.bf16.msra.mxu0 0
  %324 = vmatprep.subr.bf16.mxu0 0
  %325 = vmatpush1.bf16.msra.mxu0 0
  %326 = vmatprep.subr.bf16.mxu0 0
  %327 = vmatpush1.bf16.msra.mxu0 0
  %328 = vmatprep.subr.bf16.mxu0 0
  %329 = vmatpush1.bf16.msra.mxu0 0
  %330 = vmatprep.subr.bf16.mxu0 0
  %331 = vmatpush1.bf16.msra.mxu0 0
  %332 = vmatprep.subr.bf16.mxu0 0
  %333 = vmatpush1.bf16.msra.mxu0 0
  %334 = vmatprep.mubr.bf16.mxu0 %v259
  %335 = vmatmul.mubr.bf16.gmra.mrb[0].mxu0 %v102
  %v336 = vpop.f32.mrb[0].mxu0
  %v337 = vadd.f32 %v296, %v336
  %v338 = vpop.f32.mrb[0].mxu0
  %v339 = vpop.f32.mrb[0].mxu0
  %v340 = vadd.f32 %v299, %v339
  %v341 = vpop.f32.mrb[0].mxu0
  %342 = vdwg.mxu0
  %v343 = vmax.f32 %v337, 0.0
  %v344 = vmax.f32 %v340, 0.0
  %v345 = vpack.c.bf16 %v344, %v343
  %v346 = vld [vmem:[%s3] sm:$0xf]
  %v347 = vld [vmem:[%s3 + $0x4] sm:$0xf]
  %v348 = vld [vmem:[%s3 + $0x8] sm:$0xf]
  %v349 = vld [vmem:[%s3 + $0xc] sm:$0xf]
  %v350 = vld [vmem:[%s3 + $0x10] sm:$0xf]
  %v351 = vld [vmem:[%s3 + $0x14] sm:$0xf]
  %v352 = vld [vmem:[%s3 + $0x18] sm:$0xf]
  %v353 = vld [vmem:[%s3 + $0x1c] sm:$0xf]
  %v354 = vld [vmem:[%s3 + $0x20] sm:$0xf]
  %v355 = vld [vmem:[%s3 + $0x24] sm:$0xf]
  %v356 = vld [vmem:[%s3 + $0x28] sm:$0xf]
  %v357 = vld [vmem:[%s3 + $0x2c] sm:$0xf]
  %v358 = vld [vmem:[%s3 + $0x30] sm:$0xf]
  %v359 = vld [vmem:[%s3 + $0x34] sm:$0xf]
  %v360 = vld [vmem:[%s3 + $0x38] sm:$0xf]
  %v361 = vld [vmem:[%s3 + $0x3c] sm:$0xf]
  %v362 = vld [vmem:[%s4] sm:$0x1]
  %v364 = vlaneseq
  %v365 = vshrl.u32 %v364, 7
  %v366 = vsub.s32 0, %v365
  %v367 = vrot.slane %v362, %v366
  %v385 = vunpack.c.l.b16 %v346
  %v386 = vunpack.c.l.b16 %v347
  %v387 = vunpack.c.l.b16 %v348
  %v388 = vunpack.c.l.b16 %v349
  %v389 = vunpack.c.l.b16 %v350
  %v390 = vunpack.c.l.b16 %v351
  %v391 = vunpack.c.l.b16 %v352
  %v392 = vunpack.c.l.b16 %v353
  %v393 = vunpack.c.l.b16 %v354
  %v394 = vunpack.c.l.b16 %v355
  %v395 = vunpack.c.l.b16 %v356
  %v396 = vunpack.c.l.b16 %v357
  %v397 = vunpack.c.l.b16 %v358
  %v398 = vunpack.c.l.b16 %v359
  %v399 = vunpack.c.l.b16 %v360
  %v400 = vunpack.c.l.b16 %v361
  %v401 = vpack.c.b16 %v386, %v385
  %v402 = vpack.c.b16 %v388, %v387
  %v403 = vpack.c.b16 %v390, %v389
  %v404 = vpack.c.b16 %v392, %v391
  %v405 = vpack.c.b16 %v394, %v393
  %v406 = vpack.c.b16 %v396, %v395
  %v407 = vpack.c.b16 %v398, %v397
  %v408 = vpack.c.b16 %v400, %v399
  %417 = vmatprep.subr.bf16.mxu0 0
  %418 = vmatpush1.bf16.msra.mxu0 %v401
  %419 = vmatprep.subr.bf16.mxu0 0
  %420 = vmatpush1.bf16.msra.mxu0 %v402
  %421 = vmatprep.subr.bf16.mxu0 0
  %422 = vmatpush1.bf16.msra.mxu0 %v403
  %423 = vmatprep.subr.bf16.mxu0 0
  %424 = vmatpush1.bf16.msra.mxu0 %v404
  %425 = vmatprep.subr.bf16.mxu0 0
  %426 = vmatpush1.bf16.msra.mxu0 %v405
  %427 = vmatprep.subr.bf16.mxu0 0
  %428 = vmatpush1.bf16.msra.mxu0 %v406
  %429 = vmatprep.subr.bf16.mxu0 0
  %430 = vmatpush1.bf16.msra.mxu0 %v407
  %431 = vmatprep.subr.bf16.mxu0 0
  %432 = vmatpush1.bf16.msra.mxu0 %v408
  %433 = vmatprep.subr.bf16.mxu0 0
  %434 = vmatpush1.bf16.msra.mxu0 0
  %435 = vmatprep.subr.bf16.mxu0 0
  %436 = vmatpush1.bf16.msra.mxu0 0
  %437 = vmatprep.subr.bf16.mxu0 0
  %438 = vmatpush1.bf16.msra.mxu0 0
  %439 = vmatprep.subr.bf16.mxu0 0
  %440 = vmatpush1.bf16.msra.mxu0 0
  %441 = vmatprep.subr.bf16.mxu0 0
  %442 = vmatpush1.bf16.msra.mxu0 0
  %443 = vmatprep.subr.bf16.mxu0 0
  %444 = vmatpush1.bf16.msra.mxu0 0
  %445 = vmatprep.subr.bf16.mxu0 0
  %446 = vmatpush1.bf16.msra.mxu0 0
  %447 = vmatprep.subr.bf16.mxu0 0
  %448 = vmatpush1.bf16.msra.mxu0 0
  %449 = vmatprep.mubr.bf16.mxu0 0
  %450 = vmatmul.mubr.bf16.gmra.mrb[0].mxu0 %v345
  %v451 = vpop.f32.mrb[0].mxu0
  %v452 = vadd.f32 %v367, %v451
  %v453 = vpop.f32.mrb[0].mxu0
  %v454 = vpop.f32.mrb[0].mxu0
  %v455 = vadd.f32 %v367, %v454
  %v456 = vpop.f32.mrb[0].mxu0
  %457 = vdwg.mxu0
  %v458 = vmax.f32 %v452, 0.0
  %v459 = vmax.f32 %v455, 0.0
  %v460 = vpack.c.bf16 %v459, %v458
  %v461 = vld [vmem:[%s5] sm:$0xf]
  %v462 = vld [vmem:[%s5 + $0x4] sm:$0xf]
  %v463 = vld [vmem:[%s5 + $0x8] sm:$0xf]
  %v464 = vld [vmem:[%s5 + $0xc] sm:$0xf]
  %v465 = vld [vmem:[%s5 + $0x10] sm:$0xf]
  %v466 = vld [vmem:[%s5 + $0x14] sm:$0xf]
  %v467 = vld [vmem:[%s5 + $0x18] sm:$0xf]
  %v468 = vld [vmem:[%s5 + $0x1c] sm:$0xf]
  %v469 = vld [vmem:[%s5 + $0x20] sm:$0xf]
  %v470 = vld [vmem:[%s5 + $0x24] sm:$0xf]
  %v471 = vld [vmem:[%s5 + $0x28] sm:$0xf]
  %v472 = vld [vmem:[%s5 + $0x2c] sm:$0xf]
  %v473 = vld [vmem:[%s5 + $0x30] sm:$0xf]
  %v474 = vld [vmem:[%s5 + $0x34] sm:$0xf]
  %v475 = vld [vmem:[%s5 + $0x38] sm:$0xf]
  %v476 = vld [vmem:[%s5 + $0x3c] sm:$0xf]
  %v477 = vld [vmem:[%s6] sm:$0x1]
  %v479 = vlaneseq
  %v480 = vshrl.u32 %v479, 7
  %v481 = vsub.s32 0, %v480
  %v482 = vrot.slane %v477, %v481
  %v500 = vunpack.c.l.b16 %v461
  %v501 = vunpack.c.l.b16 %v462
  %v502 = vunpack.c.l.b16 %v463
  %v503 = vunpack.c.l.b16 %v464
  %v504 = vunpack.c.l.b16 %v465
  %v505 = vunpack.c.l.b16 %v466
  %v506 = vunpack.c.l.b16 %v467
  %v507 = vunpack.c.l.b16 %v468
  %v508 = vunpack.c.l.b16 %v469
  %v509 = vunpack.c.l.b16 %v470
  %v510 = vunpack.c.l.b16 %v471
  %v511 = vunpack.c.l.b16 %v472
  %v512 = vunpack.c.l.b16 %v473
  %v513 = vunpack.c.l.b16 %v474
  %v514 = vunpack.c.l.b16 %v475
  %v515 = vunpack.c.l.b16 %v476
  %v516 = vpack.c.b16 %v501, %v500
  %v517 = vpack.c.b16 %v503, %v502
  %v518 = vpack.c.b16 %v505, %v504
  %v519 = vpack.c.b16 %v507, %v506
  %v520 = vpack.c.b16 %v509, %v508
  %v521 = vpack.c.b16 %v511, %v510
  %v522 = vpack.c.b16 %v513, %v512
  %v523 = vpack.c.b16 %v515, %v514
  %532 = vmatprep.subr.bf16.mxu0 0
  %533 = vmatpush1.bf16.msra.mxu0 %v516
  %534 = vmatprep.subr.bf16.mxu0 0
  %535 = vmatpush1.bf16.msra.mxu0 %v517
  %536 = vmatprep.subr.bf16.mxu0 0
  %537 = vmatpush1.bf16.msra.mxu0 %v518
  %538 = vmatprep.subr.bf16.mxu0 0
  %539 = vmatpush1.bf16.msra.mxu0 %v519
  %540 = vmatprep.subr.bf16.mxu0 0
  %541 = vmatpush1.bf16.msra.mxu0 %v520
  %542 = vmatprep.subr.bf16.mxu0 0
  %543 = vmatpush1.bf16.msra.mxu0 %v521
  %544 = vmatprep.subr.bf16.mxu0 0
  %545 = vmatpush1.bf16.msra.mxu0 %v522
  %546 = vmatprep.subr.bf16.mxu0 0
  %547 = vmatpush1.bf16.msra.mxu0 %v523
  %548 = vmatprep.subr.bf16.mxu0 0
  %549 = vmatpush1.bf16.msra.mxu0 0
  %550 = vmatprep.subr.bf16.mxu0 0
  %551 = vmatpush1.bf16.msra.mxu0 0
  %552 = vmatprep.subr.bf16.mxu0 0
  %553 = vmatpush1.bf16.msra.mxu0 0
  %554 = vmatprep.subr.bf16.mxu0 0
  %555 = vmatpush1.bf16.msra.mxu0 0
  %556 = vmatprep.subr.bf16.mxu0 0
  %557 = vmatpush1.bf16.msra.mxu0 0
  %558 = vmatprep.subr.bf16.mxu0 0
  %559 = vmatpush1.bf16.msra.mxu0 0
  %560 = vmatprep.subr.bf16.mxu0 0
  %561 = vmatpush1.bf16.msra.mxu0 0
  %562 = vmatprep.subr.bf16.mxu0 0
  %563 = vmatpush1.bf16.msra.mxu0 0
  %564 = vmatprep.mubr.bf16.mxu0 0
  %565 = vmatmul.mubr.bf16.gmra.mrb[0].mxu0 %v460
  %v566 = vpop.f32.mrb[0].mxu0
  %v567 = vadd.f32 %v482, %v566
  %v568 = vpop.f32.mrb[0].mxu0
  %v569 = vpop.f32.mrb[0].mxu0
  %v570 = vadd.f32 %v482, %v569
  %v571 = vpop.f32.mrb[0].mxu0
  %572 = vdwg.mxu0
  %573 = vst [vmem:[%s7] sm:$0xff] %v567
  %574 = vst [vmem:[%s7 + $0x8] sm:$0xff] %v570
  // Predicated region
  $region30: #{lenet5a_forward.5} parent=0 // pred_check
    _
  $region31: #{lenet5a_forward.5} parent=0 // pred_check_branch
    %576 = sbr.rel (0) target = $region33
  $region32: #{lenet5a_forward.5} parent=0 // pred_region
    _
  $region33: #{lenet5a_forward.5} parent=0 // pred_fallthru
    _
  // Predicated region
  $region34: #{lenet5a_forward.5} parent=0 // pred_check
    _
  $region35: #{lenet5a_forward.5} parent=0 // pred_check_branch
    %578 = sbr.rel (0) target = $region37
  $region36: #{lenet5a_forward.5} parent=0 // pred_region
    _
  $region37: #{lenet5a_forward.5} parent=0 // pred_fallthru
    _

</llo_original>
